<compile_context>
chip_gen: v7x
topology: tpu7x:2x2x1
jax: 0.10.0
libtpu: 0.0.40
codegen_flags: <defaults>
</compile_context>

<pallas_src>
import functools

import jax
import jax.numpy as jnp
from jax.experimental import pallas as pl
from jax.experimental.pallas import tpu as pltpu


def _layer_norm(x, gamma, beta, eps=1e-7):
    # x: (S, D) f32; gamma/beta: (1, D) f32.  Matches torch.nn.LayerNorm(eps=1e-07).
    mean = jnp.mean(x, axis=-1, keepdims=True)
    var = jnp.mean((x - mean) ** 2, axis=-1, keepdims=True)
    inv = jax.lax.rsqrt(var + eps)
    return (x - mean) * inv * gamma + beta


def transformer_stack_kernel(
    x_ref,
    ln1g_ref, ln1b_ref,
    wqkv_ref, bqkv_ref, wo_ref, bo_ref,
    ln2g_ref, ln2b_ref,
    w1_ref, b1_ref, w2_ref, b2_ref,
    o_ref,
    act_ref,
    *, num_heads,
):
    layer = pl.program_id(1)
    num_layers = pl.num_programs(1)
    bf16 = jnp.bfloat16

    # Load the input into the VMEM-resident activation scratch on the first
    # layer of each batch element; later layers reuse it (no HBM round trips).
    @pl.when(layer == 0)
    def _():
        act_ref[...] = x_ref[0].astype(jnp.float32)

    x = act_ref[...]                              # (S, D) f32 residual stream
    S, D = x.shape
    dh = D // num_heads
    g = 3 * num_heads
    scale = 1.0 / (dh ** 0.5)

    # ---- LayerNorm 1 (f32) ----
    normed = _layer_norm(x, ln1g_ref[0], ln1b_ref[0])

    # ---- Fused QKV projection: single head-batched bf16 einsum on the MXU ----
    # wqkv_ref[0]: (3*H, D, dh) bf16, packed [q heads | k heads | v heads].
    normed_b = jnp.broadcast_to(normed.astype(bf16), (g, S, D))
    proj = jnp.einsum('gsd,gde->gse', normed_b, wqkv_ref[0],
                      preferred_element_type=jnp.float32) + bqkv_ref[0]   # (3H, S, dh) f32
    q = proj[0 * num_heads:1 * num_heads]         # (H, S, dh)
    k = proj[1 * num_heads:2 * num_heads]
    v = proj[2 * num_heads:3 * num_heads]

    # ---- Attention, batched over heads (leading-batch einsums) ----
    scores = jnp.einsum('hqd,hkd->hqk', q.astype(bf16), k.astype(bf16),
                        preferred_element_type=jnp.float32) * scale       # (H, S, S)
    scores = scores - jnp.max(scores, axis=-1, keepdims=True)
    p = jnp.exp(scores)
    denom = jnp.sum(p, axis=-1, keepdims=True)                            # (H, S, 1)
    ctx = jnp.einsum('hqk,hkd->hqd', p.astype(bf16), v.astype(bf16),
                     preferred_element_type=jnp.float32)                  # (H, S, dh)
    ctx = ctx * pl.reciprocal(denom, approx=True)   # softmax norm folded in (EUP)

    # Output projection: per-head (dh, D) weights, batched matmul + head-sum
    # (equivalent to concat(heads) @ Wo, but with no lane-sliced concatenate).
    attn_h = jnp.einsum('hsd,hde->hse', ctx.astype(bf16), wo_ref[0],
                        preferred_element_type=jnp.float32)               # (H, S, D)
    attn = jnp.sum(attn_h, axis=0) + bo_ref[0]                            # (S, D)

    x = x + attn                                                          # residual 1

    # ---- LayerNorm 2 + FeedForward (hidden = 2*D, mish) ----
    normed2 = _layer_norm(x, ln2g_ref[0], ln2b_ref[0])
    h1 = jnp.dot(normed2.astype(bf16), w1_ref[0],
                 preferred_element_type=jnp.float32) + b1_ref[0]          # (S, 2D)
    mish = h1 * jnp.tanh(jnp.logaddexp(h1, 0.0))                          # x * tanh(softplus(x))
    ff = jnp.dot(mish.astype(bf16), w2_ref[0],
                 preferred_element_type=jnp.float32) + b2_ref[0]

    x = x + ff                                                            # residual 2
    act_ref[...] = x

    # Write the HBM output block only after the last layer of this batch item.
    @pl.when(layer == num_layers - 1)
    def _():
        o_ref[0] = x.astype(o_ref.dtype)


def model_forward(x, positions, packed_params, num_heads):
    """x: (B, S, D) f32; packed_params: list of layer-stacked weight arrays."""
    # positions is unused in the self-attention (non-Hyena) configuration.
    del positions
    B, S, D = x.shape
    H = 2 * D
    dh = D // num_heads
    L = packed_params[0].shape[0]

    x_spec = pl.BlockSpec((1, S, D), lambda b, l: (b, 0, 0))

    def wspec(shape):
        # Per-layer weight block: constant across batch, steps with the inner
        # "arbitrary" layer axis (next layer's weights prefetched during
        # the current layer's compute).
        ndim = len(shape)
        return pl.BlockSpec((1,) + shape, lambda b, l, _n=ndim: (l,) + (0,) * _n)

    in_specs = [
        x_spec,
        wspec((1, D)), wspec((1, D)),                       # ln1 gamma, beta
        wspec((3 * num_heads, D, dh)),                      # fused Wqkv (head-packed, bf16)
        wspec((3 * num_heads, 1, dh)),                      # fused bqkv
        wspec((num_heads, dh, D)), wspec((1, D)),           # Wo (head-split, bf16), bo
        wspec((1, D)), wspec((1, D)),                       # ln2 gamma, beta
        wspec((D, H)), wspec((1, H)),                       # W1 (bf16), b1
        wspec((H, D)), wspec((1, D)),                       # W2 (bf16), b2
    ]

    kernel = functools.partial(transformer_stack_kernel, num_heads=num_heads)

    return pl.pallas_call(
        kernel,
        out_shape=jax.ShapeDtypeStruct((B, S, D), x.dtype),
        grid=(B, L),
        in_specs=in_specs,
        out_specs=x_spec,
        scratch_shapes=[pltpu.VMEM((S, D), jnp.float32)],   # layer-resident activations
        compiler_params=pltpu.CompilerParams(
            dimension_semantics=("parallel", "arbitrary"),
            # Explicit (conservative) scoped-VMEM budget; raise for large D.
            vmem_limit_bytes=32 * 1024 * 1024,
        ),
    )(x, *packed_params)


# ----------------------- parameter init / packing --------------------------

def init_layer_params(key, emb_dim):
    """Raw per-layer parameters, mirroring the PyTorch module (x @ W + b)."""
    D, H = emb_dim, 2 * emb_dim
    keys = jax.random.split(key, 12)
    sc_d = 1.0 / (D ** 0.5)
    sc_h = 1.0 / (H ** 0.5)
    return dict(
        ln1_g=jnp.ones((D,), jnp.float32), ln1_b=jnp.zeros((D,), jnp.float32),
        wq=jax.random.normal(keys[0], (D, D), jnp.float32) * sc_d,
        bq=jax.random.normal(keys[1], (D,), jnp.float32) * 0.01,
        wk=jax.random.normal(keys[2], (D, D), jnp.float32) * sc_d,
        bk=jax.random.normal(keys[3], (D,), jnp.float32) * 0.01,
        wv=jax.random.normal(keys[4], (D, D), jnp.float32) * sc_d,
        bv=jax.random.normal(keys[5], (D,), jnp.float32) * 0.01,
        wo=jax.random.normal(keys[6], (D, D), jnp.float32) * sc_d,
        bo=jax.random.normal(keys[7], (D,), jnp.float32) * 0.01,
        ln2_g=jnp.ones((D,), jnp.float32), ln2_b=jnp.zeros((D,), jnp.float32),
        w1=jax.random.normal(keys[8], (D, H), jnp.float32) * sc_d,
        b1=jax.random.normal(keys[9], (H,), jnp.float32) * 0.01,
        w2=jax.random.normal(keys[10], (H, D), jnp.float32) * sc_h,
        b2=jax.random.normal(keys[11], (D,), jnp.float32) * 0.01,
    )


def _split_heads_proj(w, b, num_heads):
    # w: (D, D) used as x @ w; b: (D,).  ->  (H, D, dh), (H, 1, dh)
    D = w.shape[0]
    dh = D // num_heads
    w_h = jnp.transpose(w.reshape(D, num_heads, dh), (1, 0, 2))
    b_h = b.reshape(num_heads, 1, dh)
    return w_h, b_h


def pack_layer_params(p, num_heads):
    """Pack one layer into the kernel-friendly layout (bf16 matmul weights)."""
    D = p["wo"].shape[0]
    dh = D // num_heads
    wq_h, bq_h = _split_heads_proj(p["wq"], p["bq"], num_heads)
    wk_h, bk_h = _split_heads_proj(p["wk"], p["bk"], num_heads)
    wv_h, bv_h = _split_heads_proj(p["wv"], p["bv"], num_heads)
    return [
        p["ln1_g"].reshape(1, D), p["ln1_b"].reshape(1, D),
        jnp.concatenate([wq_h, wk_h, wv_h], 0).astype(jnp.bfloat16),  # (3H, D, dh)
        jnp.concatenate([bq_h, bk_h, bv_h], 0),                        # (3H, 1, dh) f32
        p["wo"].reshape(num_heads, dh, D).astype(jnp.bfloat16),       # (H, dh, D)
        p["bo"].reshape(1, D),
        p["ln2_g"].reshape(1, D), p["ln2_b"].reshape(1, D),
        p["w1"].astype(jnp.bfloat16), p["b1"].reshape(1, -1),
        p["w2"].astype(jnp.bfloat16), p["b2"].reshape(1, D),
    ]


def pack_model_params(per_layer_params, num_heads):
    packed = [pack_layer_params(p, num_heads) for p in per_layer_params]
    return [jnp.stack([lp[i] for lp in packed], axis=0) for i in range(len(packed[0]))]


if __name__ == "__main__":
    # Small config consistent with the module's forward:
    #   x: (batch, seq_len, emb_dim), positions: (batch, seq_len)
    B, S, D = 2, 8, 32
    HEADS = 4
    NUM_LAYERS = 2

    key = jax.random.PRNGKey(0)
    k_x, k_p = jax.random.split(key, 2)
    x = jax.random.normal(k_x, (B, S, D), jnp.float32)
    positions = jnp.tile(jnp.arange(S, dtype=jnp.int32)[None, :], (B, 1))

    layer_keys = jax.random.split(k_p, NUM_LAYERS)
    raw_params = [init_layer_params(lk, D) for lk in layer_keys]
    packed_params = pack_model_params(raw_params, HEADS)

    out = model_forward(x, positions, packed_params, HEADS)
    out = jax.block_until_ready(out)
    assert out.shape == (B, S, D)
    print("KERNEL_OK")
</pallas_src>

<mosaic_0001>
module attributes {stable_mosaic.version = 11 : i64} {
  func.func @transformer_stack_kernel(%arg0: i32, %arg1: i32, %arg2: memref<1x8x32xf32, #tpu.memory_space<vmem>>, %arg3: memref<1x1x32xf32, #tpu.memory_space<vmem>>, %arg4: memref<1x1x32xf32, #tpu.memory_space<vmem>>, %arg5: memref<1x12x32x8xbf16, #tpu.memory_space<vmem>>, %arg6: memref<1x12x1x8xf32, #tpu.memory_space<vmem>>, %arg7: memref<1x4x8x32xbf16, #tpu.memory_space<vmem>>, %arg8: memref<1x1x32xf32, #tpu.memory_space<vmem>>, %arg9: memref<1x1x32xf32, #tpu.memory_space<vmem>>, %arg10: memref<1x1x32xf32, #tpu.memory_space<vmem>>, %arg11: memref<1x32x64xbf16, #tpu.memory_space<vmem>>, %arg12: memref<1x1x64xf32, #tpu.memory_space<vmem>>, %arg13: memref<1x64x32xbf16, #tpu.memory_space<vmem>>, %arg14: memref<1x1x32xf32, #tpu.memory_space<vmem>>, %arg15: memref<1x8x32xf32, #tpu.memory_space<vmem>>, %arg16: memref<8x32xf32, #tpu.memory_space<vmem>>) attributes {dimension_semantics = [#tpu.dimension_semantics<parallel>, #tpu.dimension_semantics<arbitrary>], iteration_bounds = array<i64: 2, 2>, scalar_prefetch = 0 : i64, scratch_operands = 1 : i64, tpu.core_type = #tpu.core_type<tc>, window_params = [{transform_indices = @transform_0, window_bounds = array<i64: 1, 8, 32>}, {transform_indices = @transform_1, window_bounds = array<i64: 1, 1, 32>}, {transform_indices = @transform_2, window_bounds = array<i64: 1, 1, 32>}, {transform_indices = @transform_3, window_bounds = array<i64: 1, 12, 32, 8>}, {transform_indices = @transform_4, window_bounds = array<i64: 1, 12, 1, 8>}, {transform_indices = @transform_5, window_bounds = array<i64: 1, 4, 8, 32>}, {transform_indices = @transform_6, window_bounds = array<i64: 1, 1, 32>}, {transform_indices = @transform_7, window_bounds = array<i64: 1, 1, 32>}, {transform_indices = @transform_8, window_bounds = array<i64: 1, 1, 32>}, {transform_indices = @transform_9, window_bounds = array<i64: 1, 32, 64>}, {transform_indices = @transform_10, window_bounds = array<i64: 1, 1, 64>}, {transform_indices = @transform_11, window_bounds = array<i64: 1, 64, 32>}, {transform_indices = @transform_12, window_bounds = array<i64: 1, 1, 32>}, {transform_indices = @transform_13, window_bounds = array<i64: 1, 8, 32>}]} {
    %c0_i32 = arith.constant 0 : i32
    %0 = arith.cmpi eq, %arg1, %c0_i32 : i32
    %1 = arith.extui %0 : i1 to i32
    %c0_i32_0 = arith.constant 0 : i32
    %2 = arith.cmpi ne, %1, %c0_i32_0 : i32
    scf.if %2 {
      %c0_65 = arith.constant 0 : index
      %c0_66 = arith.constant 0 : index
      %c0_67 = arith.constant 0 : index
      %134 = vector.load %arg2[%c0_65, %c0_66, %c0_67] : memref<1x8x32xf32, #tpu.memory_space<vmem>>, vector<1x8x32xf32>
      %135 = vector.shape_cast %134 : vector<1x8x32xf32> to vector<8x32xf32>
      %c0_68 = arith.constant 0 : index
      %c0_69 = arith.constant 0 : index
      %136 = vector.load %arg16[%c0_68, %c0_69] : memref<8x32xf32, #tpu.memory_space<vmem>>, vector<8x32xf32>
      tpu.vector_store %arg16[%c0_68, %c0_69], %135 {strides = array<i32>} : memref<8x32xf32, #tpu.memory_space<vmem>>, vector<8x32xf32>,
    } else {
    }
    %c0 = arith.constant 0 : index
    %c0_1 = arith.constant 0 : index
    %3 = vector.load %arg16[%c0, %c0_1] : memref<8x32xf32, #tpu.memory_space<vmem>>, vector<8x32xf32>
    %c0_2 = arith.constant 0 : index
    %c0_3 = arith.constant 0 : index
    %c0_4 = arith.constant 0 : index
    %4 = vector.load %arg3[%c0_2, %c0_3, %c0_4] : memref<1x1x32xf32, #tpu.memory_space<vmem>>, vector<1x1x32xf32>
    %5 = vector.shape_cast %4 : vector<1x1x32xf32> to vector<1x32xf32>
    %c0_5 = arith.constant 0 : index
    %c0_6 = arith.constant 0 : index
    %c0_7 = arith.constant 0 : index
    %6 = vector.load %arg4[%c0_5, %c0_6, %c0_7] : memref<1x1x32xf32, #tpu.memory_space<vmem>>, vector<1x1x32xf32>
    %7 = vector.shape_cast %6 : vector<1x1x32xf32> to vector<1x32xf32>
    %cst = arith.constant dense<0.000000e+00> : vector<8xf32>
    %8 = vector.multi_reduction <add>, %3, %cst [1] : vector<8x32xf32> to vector<8xf32>
    %9 = vector.shape_cast %8 : vector<8xf32> to vector<8x1xf32>
    %cst_8 = arith.constant 3.200000e+01 : f32
    %10 = vector.broadcast %cst_8 : f32 to vector<8x1xf32>
    %11 = arith.divf %9, %10 : vector<8x1xf32>
    %12 = vector.broadcast %11 : vector<8x1xf32> to vector<8x32xf32>
    %13 = arith.subf %3, %12 : vector<8x32xf32>
    %14 = arith.mulf %13, %13 : vector<8x32xf32>
    %cst_9 = arith.constant dense<0.000000e+00> : vector<8xf32>
    %15 = vector.multi_reduction <add>, %14, %cst_9 [1] : vector<8x32xf32> to vector<8xf32>
    %16 = vector.shape_cast %15 : vector<8xf32> to vector<8x1xf32>
    %cst_10 = arith.constant 3.200000e+01 : f32
    %17 = vector.broadcast %cst_10 : f32 to vector<8x1xf32>
    %18 = arith.divf %16, %17 : vector<8x1xf32>
    %cst_11 = arith.constant 1.000000e-07 : f32
    %19 = vector.broadcast %cst_11 : f32 to vector<8x1xf32>
    %20 = arith.addf %18, %19 : vector<8x1xf32>
    %21 = math.rsqrt %20 : vector<8x1xf32>
    %22 = vector.broadcast %11 : vector<8x1xf32> to vector<8x32xf32>
    %23 = arith.subf %3, %22 : vector<8x32xf32>
    %24 = vector.broadcast %21 : vector<8x1xf32> to vector<8x32xf32>
    %25 = arith.mulf %23, %24 : vector<8x32xf32>
    %26 = vector.broadcast %5 : vector<1x32xf32> to vector<8x32xf32>
    %27 = arith.mulf %25, %26 : vector<8x32xf32>
    %28 = vector.broadcast %7 : vector<1x32xf32> to vector<8x32xf32>
    %29 = arith.addf %27, %28 : vector<8x32xf32>
    %30 = arith.truncf %29 : vector<8x32xf32> to vector<8x32xbf16>
    %31 = vector.shape_cast %30 : vector<8x32xbf16> to vector<1x8x32xbf16>
    %32 = vector.broadcast %31 : vector<1x8x32xbf16> to vector<12x8x32xbf16>
    %c0_12 = arith.constant 0 : index
    %c0_13 = arith.constant 0 : index
    %c0_14 = arith.constant 0 : index
    %c0_15 = arith.constant 0 : index
    %33 = vector.load %arg5[%c0_12, %c0_13, %c0_14, %c0_15] : memref<1x12x32x8xbf16, #tpu.memory_space<vmem>>, vector<1x12x32x8xbf16>
    %34 = vector.shape_cast %33 : vector<1x12x32x8xbf16> to vector<12x32x8xbf16>
    "tpu.trace_start"() <{level = 10 : i32, message = "gsd,gde->gse"}> : () -> ()
    %cst_16 = arith.constant dense<0.000000e+00> : vector<12x8x8xf32>
    %35 = tpu.matmul %32, %34, %cst_16 {dimension_numbers = #tpu.dot_dimension_numbers<[2], [1], [1], [2], [0, 0, 0, 1, 1, 2], [0], [0]>} : vector<12x8x32xbf16>, vector<12x32x8xbf16>, vector<12x8x8xf32> -> vector<12x8x8xf32>
    "tpu.trace_stop"() : () -> ()
    %c0_17 = arith.constant 0 : index
    %c0_18 = arith.constant 0 : index
    %c0_19 = arith.constant 0 : index
    %c0_20 = arith.constant 0 : index
    %36 = vector.load %arg6[%c0_17, %c0_18, %c0_19, %c0_20] : memref<1x12x1x8xf32, #tpu.memory_space<vmem>>, vector<1x12x1x8xf32>
    %37 = vector.shape_cast %36 : vector<1x12x1x8xf32> to vector<12x1x8xf32>
    %38 = vector.broadcast %37 : vector<12x1x8xf32> to vector<12x8x8xf32>
    %39 = arith.addf %35, %38 : vector<12x8x8xf32>
    %40 = vector.extract_strided_slice %39 {offsets = [0, 0, 0], sizes = [4, 8, 8], strides = [1, 1, 1]} : vector<12x8x8xf32> to vector<4x8x8xf32>
    %41 = vector.extract_strided_slice %39 {offsets = [4, 0, 0], sizes = [4, 8, 8], strides = [1, 1, 1]} : vector<12x8x8xf32> to vector<4x8x8xf32>
    %42 = vector.extract_strided_slice %39 {offsets = [8, 0, 0], sizes = [4, 8, 8], strides = [1, 1, 1]} : vector<12x8x8xf32> to vector<4x8x8xf32>
    %43 = arith.truncf %40 : vector<4x8x8xf32> to vector<4x8x8xbf16>
    %44 = arith.truncf %41 : vector<4x8x8xf32> to vector<4x8x8xbf16>
    "tpu.trace_start"() <{level = 10 : i32, message = "hqd,hkd->hqk"}> : () -> ()
    %cst_21 = arith.constant dense<0.000000e+00> : vector<4x8x8xf32>
    %45 = tpu.matmul %43, %44, %cst_21 {dimension_numbers = #tpu.dot_dimension_numbers<[2], [2], [1], [1], [0, 0, 0, 1, 1, 1], [0], [0]>} : vector<4x8x8xbf16>, vector<4x8x8xbf16>, vector<4x8x8xf32> -> vector<4x8x8xf32>
    "tpu.trace_stop"() : () -> ()
    %cst_22 = arith.constant 0.353553385 : f32
    %46 = vector.broadcast %cst_22 : f32 to vector<4x8x8xf32>
    %47 = arith.mulf %45, %46 : vector<4x8x8xf32>
    %cst_23 = arith.constant dense<0xFF800000> : vector<4x8xf32>
    %48 = vector.multi_reduction <maximumf>, %47, %cst_23 [2] : vector<4x8x8xf32> to vector<4x8xf32>
    %49 = vector.shape_cast %48 : vector<4x8xf32> to vector<4x8x1xf32>
    %50 = vector.broadcast %49 : vector<4x8x1xf32> to vector<4x8x8xf32>
    %51 = arith.subf %47, %50 : vector<4x8x8xf32>
    %52 = math.exp %51 : vector<4x8x8xf32>
    %cst_24 = arith.constant dense<0.000000e+00> : vector<4x8xf32>
    %53 = vector.multi_reduction <add>, %52, %cst_24 [2] : vector<4x8x8xf32> to vector<4x8xf32>
    %54 = vector.shape_cast %53 : vector<4x8xf32> to vector<4x8x1xf32>
    %55 = arith.truncf %52 : vector<4x8x8xf32> to vector<4x8x8xbf16>
    %56 = arith.truncf %42 : vector<4x8x8xf32> to vector<4x8x8xbf16>
    "tpu.trace_start"() <{level = 10 : i32, message = "hqk,hkd->hqd"}> : () -> ()
    %cst_25 = arith.constant dense<0.000000e+00> : vector<4x8x8xf32>
    %57 = tpu.matmul %55, %56, %cst_25 {dimension_numbers = #tpu.dot_dimension_numbers<[2], [1], [1], [2], [0, 0, 0, 1, 1, 2], [0], [0]>} : vector<4x8x8xbf16>, vector<4x8x8xbf16>, vector<4x8x8xf32> -> vector<4x8x8xf32>
    "tpu.trace_stop"() : () -> ()
    %58 = tpu.reciprocal %54 {approx = true} : vector<4x8x1xf32> -> vector<4x8x1xf32>
    %59 = vector.broadcast %58 : vector<4x8x1xf32> to vector<4x8x8xf32>
    %60 = arith.mulf %57, %59 : vector<4x8x8xf32>
    %61 = arith.truncf %60 : vector<4x8x8xf32> to vector<4x8x8xbf16>
    %c0_26 = arith.constant 0 : index
    %c0_27 = arith.constant 0 : index
    %c0_28 = arith.constant 0 : index
    %c0_29 = arith.constant 0 : index
    %62 = vector.load %arg7[%c0_26, %c0_27, %c0_28, %c0_29] : memref<1x4x8x32xbf16, #tpu.memory_space<vmem>>, vector<1x4x8x32xbf16>
    %63 = vector.shape_cast %62 : vector<1x4x8x32xbf16> to vector<4x8x32xbf16>
    "tpu.trace_start"() <{level = 10 : i32, message = "hsd,hde->hse"}> : () -> ()
    %cst_30 = arith.constant dense<0.000000e+00> : vector<4x8x32xf32>
    %64 = tpu.matmul %61, %63, %cst_30 {dimension_numbers = #tpu.dot_dimension_numbers<[2], [1], [1], [2], [0, 0, 0, 1, 1, 2], [0], [0]>} : vector<4x8x8xbf16>, vector<4x8x32xbf16>, vector<4x8x32xf32> -> vector<4x8x32xf32>
    "tpu.trace_stop"() : () -> ()
    %cst_31 = arith.constant dense<0.000000e+00> : vector<8x32xf32>
    %65 = vector.multi_reduction <add>, %64, %cst_31 [0] : vector<4x8x32xf32> to vector<8x32xf32>
    %c0_32 = arith.constant 0 : index
    %c0_33 = arith.constant 0 : index
    %c0_34 = arith.constant 0 : index
    %66 = vector.load %arg8[%c0_32, %c0_33, %c0_34] : memref<1x1x32xf32, #tpu.memory_space<vmem>>, vector<1x1x32xf32>
    %67 = vector.shape_cast %66 : vector<1x1x32xf32> to vector<1x32xf32>
    %68 = vector.broadcast %67 : vector<1x32xf32> to vector<8x32xf32>
    %69 = arith.addf %65, %68 : vector<8x32xf32>
    %70 = arith.addf %3, %69 : vector<8x32xf32>
    %c0_35 = arith.constant 0 : index
    %c0_36 = arith.constant 0 : index
    %c0_37 = arith.constant 0 : index
    %71 = vector.load %arg9[%c0_35, %c0_36, %c0_37] : memref<1x1x32xf32, #tpu.memory_space<vmem>>, vector<1x1x32xf32>
    %72 = vector.shape_cast %71 : vector<1x1x32xf32> to vector<1x32xf32>
    %c0_38 = arith.constant 0 : index
    %c0_39 = arith.constant 0 : index
    %c0_40 = arith.constant 0 : index
    %73 = vector.load %arg10[%c0_38, %c0_39, %c0_40] : memref<1x1x32xf32, #tpu.memory_space<vmem>>, vector<1x1x32xf32>
    %74 = vector.shape_cast %73 : vector<1x1x32xf32> to vector<1x32xf32>
    %cst_41 = arith.constant dense<0.000000e+00> : vector<8xf32>
    %75 = vector.multi_reduction <add>, %70, %cst_41 [1] : vector<8x32xf32> to vector<8xf32>
    %76 = vector.shape_cast %75 : vector<8xf32> to vector<8x1xf32>
    %cst_42 = arith.constant 3.200000e+01 : f32
    %77 = vector.broadcast %cst_42 : f32 to vector<8x1xf32>
    %78 = arith.divf %76, %77 : vector<8x1xf32>
    %79 = vector.broadcast %78 : vector<8x1xf32> to vector<8x32xf32>
    %80 = arith.subf %70, %79 : vector<8x32xf32>
    %81 = arith.mulf %80, %80 : vector<8x32xf32>
    %cst_43 = arith.constant dense<0.000000e+00> : vector<8xf32>
    %82 = vector.multi_reduction <add>, %81, %cst_43 [1] : vector<8x32xf32> to vector<8xf32>
    %83 = vector.shape_cast %82 : vector<8xf32> to vector<8x1xf32>
    %cst_44 = arith.constant 3.200000e+01 : f32
    %84 = vector.broadcast %cst_44 : f32 to vector<8x1xf32>
    %85 = arith.divf %83, %84 : vector<8x1xf32>
    %cst_45 = arith.constant 1.000000e-07 : f32
    %86 = vector.broadcast %cst_45 : f32 to vector<8x1xf32>
    %87 = arith.addf %85, %86 : vector<8x1xf32>
    %88 = math.rsqrt %87 : vector<8x1xf32>
    %89 = vector.broadcast %78 : vector<8x1xf32> to vector<8x32xf32>
    %90 = arith.subf %70, %89 : vector<8x32xf32>
    %91 = vector.broadcast %88 : vector<8x1xf32> to vector<8x32xf32>
    %92 = arith.mulf %90, %91 : vector<8x32xf32>
    %93 = vector.broadcast %72 : vector<1x32xf32> to vector<8x32xf32>
    %94 = arith.mulf %92, %93 : vector<8x32xf32>
    %95 = vector.broadcast %74 : vector<1x32xf32> to vector<8x32xf32>
    %96 = arith.addf %94, %95 : vector<8x32xf32>
    %97 = arith.truncf %96 : vector<8x32xf32> to vector<8x32xbf16>
    %c0_46 = arith.constant 0 : index
    %c0_47 = arith.constant 0 : index
    %c0_48 = arith.constant 0 : index
    %98 = vector.load %arg11[%c0_46, %c0_47, %c0_48] : memref<1x32x64xbf16, #tpu.memory_space<vmem>>, vector<1x32x64xbf16>
    %99 = vector.shape_cast %98 : vector<1x32x64xbf16> to vector<32x64xbf16>
    %cst_49 = arith.constant dense<0.000000e+00> : vector<8x64xf32>
    %100 = tpu.matmul %97, %99, %cst_49 {dimension_numbers = #tpu.dot_dimension_numbers<[1], [0], [0], [1], [0, 0, 1, 1], [], []>} : vector<8x32xbf16>, vector<32x64xbf16>, vector<8x64xf32> -> vector<8x64xf32>
    %c0_50 = arith.constant 0 : index
    %c0_51 = arith.constant 0 : index
    %c0_52 = arith.constant 0 : index
    %101 = vector.load %arg12[%c0_50, %c0_51, %c0_52] : memref<1x1x64xf32, #tpu.memory_space<vmem>>, vector<1x1x64xf32>
    %102 = vector.shape_cast %101 : vector<1x1x64xf32> to vector<1x64xf32>
    %103 = vector.broadcast %102 : vector<1x64xf32> to vector<8x64xf32>
    %104 = arith.addf %100, %103 : vector<8x64xf32>
    %cst_53 = arith.constant 0.000000e+00 : f32
    %105 = vector.broadcast %cst_53 : f32 to vector<8x64xf32>
    %106 = arith.maximumf %104, %105 : vector<8x64xf32>
    %107 = vector.broadcast %cst_53 : f32 to vector<8x64xf32>
    %108 = arith.subf %104, %107 : vector<8x64xf32>
    %109 = arith.cmpf one, %108, %108 : vector<8x64xf32>
    %110 = vector.broadcast %cst_53 : f32 to vector<8x64xf32>
    %111 = arith.addf %104, %110 : vector<8x64xf32>
    %112 = math.absf %108 : vector<8x64xf32>
    %cst_54 = arith.constant 0.000000e+00 : f32
    %113 = vector.broadcast %cst_54 : f32 to vector<8x64xf32>
    %114 = arith.subf %113, %112 : vector<8x64xf32>
    %115 = math.exp %114 : vector<8x64xf32>
    %116 = math.log1p %115 : vector<8x64xf32>
    %117 = arith.addf %106, %116 : vector<8x64xf32>
    %118 = arith.select %109, %111, %117 : vector<8x64xi1>, vector<8x64xf32>
    %119 = math.tanh %118 : vector<8x64xf32>
    %120 = arith.mulf %104, %119 : vector<8x64xf32>
    %121 = arith.truncf %120 : vector<8x64xf32> to vector<8x64xbf16>
    %c0_55 = arith.constant 0 : index
    %c0_56 = arith.constant 0 : index
    %c0_57 = arith.constant 0 : index
    %122 = vector.load %arg13[%c0_55, %c0_56, %c0_57] : memref<1x64x32xbf16, #tpu.memory_space<vmem>>, vector<1x64x32xbf16>
    %123 = vector.shape_cast %122 : vector<1x64x32xbf16> to vector<64x32xbf16>
    %cst_58 = arith.constant dense<0.000000e+00> : vector<8x32xf32>
    %124 = tpu.matmul %121, %123, %cst_58 {dimension_numbers = #tpu.dot_dimension_numbers<[1], [0], [0], [1], [0, 0, 1, 1], [], []>} : vector<8x64xbf16>, vector<64x32xbf16>, vector<8x32xf32> -> vector<8x32xf32>
    %c0_59 = arith.constant 0 : index
    %c0_60 = arith.constant 0 : index
    %c0_61 = arith.constant 0 : index
    %125 = vector.load %arg14[%c0_59, %c0_60, %c0_61] : memref<1x1x32xf32, #tpu.memory_space<vmem>>, vector<1x1x32xf32>
    %126 = vector.shape_cast %125 : vector<1x1x32xf32> to vector<1x32xf32>
    %127 = vector.broadcast %126 : vector<1x32xf32> to vector<8x32xf32>
    %128 = arith.addf %124, %127 : vector<8x32xf32>
    %129 = arith.addf %70, %128 : vector<8x32xf32>
    %c0_62 = arith.constant 0 : index
    %c0_63 = arith.constant 0 : index
    %130 = vector.load %arg16[%c0_62, %c0_63] : memref<8x32xf32, #tpu.memory_space<vmem>>, vector<8x32xf32>
    tpu.vector_store %arg16[%c0_62, %c0_63], %129 {strides = array<i32>} : memref<8x32xf32, #tpu.memory_space<vmem>>, vector<8x32xf32>,
    %c1_i32 = arith.constant 1 : i32
    %131 = arith.cmpi eq, %arg1, %c1_i32 : i32
    %132 = arith.extui %131 : i1 to i32
    %c0_i32_64 = arith.constant 0 : i32
    %133 = arith.cmpi ne, %132, %c0_i32_64 : i32
    scf.if %133 {
      %c0_65 = arith.constant 0 : index
      %c0_66 = arith.constant 0 : index
      %c0_67 = arith.constant 0 : index
      %134 = vector.load %arg15[%c0_65, %c0_66, %c0_67] : memref<1x8x32xf32, #tpu.memory_space<vmem>>, vector<1x8x32xf32>
      %135 = vector.shape_cast %134 : vector<1x8x32xf32> to vector<8x32xf32>
      %136 = vector.shape_cast %129 : vector<8x32xf32> to vector<1x8x32xf32>
      tpu.vector_store %arg15[%c0_65, %c0_66, %c0_67], %136 {strides = array<i32>} : memref<1x8x32xf32, #tpu.memory_space<vmem>>, vector<1x8x32xf32>,
    } else {
    }
    return
  }
  func.func @transform_0(%arg0: i32, %arg1: i32) -> (i32, i32, i32) {
    %c0_i32 = arith.constant 0 : i32
    %c0_i32_0 = arith.constant 0 : i32
    %c0_i32_1 = arith.constant 0 : i32
    return %arg0, %c0_i32, %c0_i32_0 : i32, i32, i32
  }
  func.func @transform_1(%arg0: i32, %arg1: i32) -> (i32, i32, i32) {
    %c0_i32 = arith.constant 0 : i32
    %c0_i32_0 = arith.constant 0 : i32
    %c0_i32_1 = arith.constant 0 : i32
    return %arg1, %c0_i32, %c0_i32_0 : i32, i32, i32
  }
  func.func @transform_2(%arg0: i32, %arg1: i32) -> (i32, i32, i32) {
    %c0_i32 = arith.constant 0 : i32
    %c0_i32_0 = arith.constant 0 : i32
    %c0_i32_1 = arith.constant 0 : i32
    return %arg1, %c0_i32, %c0_i32_0 : i32, i32, i32
  }
  func.func @transform_3(%arg0: i32, %arg1: i32) -> (i32, i32, i32, i32) {
    %c0_i32 = arith.constant 0 : i32
    %c0_i32_0 = arith.constant 0 : i32
    %c0_i32_1 = arith.constant 0 : i32
    %c0_i32_2 = arith.constant 0 : i32
    return %arg1, %c0_i32, %c0_i32_0, %c0_i32_1 : i32, i32, i32, i32
  }
  func.func @transform_4(%arg0: i32, %arg1: i32) -> (i32, i32, i32, i32) {
    %c0_i32 = arith.constant 0 : i32
    %c0_i32_0 = arith.constant 0 : i32
    %c0_i32_1 = arith.constant 0 : i32
    %c0_i32_2 = arith.constant 0 : i32
    return %arg1, %c0_i32, %c0_i32_0, %c0_i32_1 : i32, i32, i32, i32
  }
  func.func @transform_5(%arg0: i32, %arg1: i32) -> (i32, i32, i32, i32) {
    %c0_i32 = arith.constant 0 : i32
    %c0_i32_0 = arith.constant 0 : i32
    %c0_i32_1 = arith.constant 0 : i32
    %c0_i32_2 = arith.constant 0 : i32
    return %arg1, %c0_i32, %c0_i32_0, %c0_i32_1 : i32, i32, i32, i32
  }
  func.func @transform_6(%arg0: i32, %arg1: i32) -> (i32, i32, i32) {
    %c0_i32 = arith.constant 0 : i32
    %c0_i32_0 = arith.constant 0 : i32
    %c0_i32_1 = arith.constant 0 : i32
    return %arg1, %c0_i32, %c0_i32_0 : i32, i32, i32
  }
  func.func @transform_7(%arg0: i32, %arg1: i32) -> (i32, i32, i32) {
    %c0_i32 = arith.constant 0 : i32
    %c0_i32_0 = arith.constant 0 : i32
    %c0_i32_1 = arith.constant 0 : i32
    return %arg1, %c0_i32, %c0_i32_0 : i32, i32, i32
  }
  func.func @transform_8(%arg0: i32, %arg1: i32) -> (i32, i32, i32) {
    %c0_i32 = arith.constant 0 : i32
    %c0_i32_0 = arith.constant 0 : i32
    %c0_i32_1 = arith.constant 0 : i32
    return %arg1, %c0_i32, %c0_i32_0 : i32, i32, i32
  }
  func.func @transform_9(%arg0: i32, %arg1: i32) -> (i32, i32, i32) {
    %c0_i32 = arith.constant 0 : i32
    %c0_i32_0 = arith.constant 0 : i32
    %c0_i32_1 = arith.constant 0 : i32
    return %arg1, %c0_i32, %c0_i32_0 : i32, i32, i32
  }
  func.func @transform_10(%arg0: i32, %arg1: i32) -> (i32, i32, i32) {
    %c0_i32 = arith.constant 0 : i32
    %c0_i32_0 = arith.constant 0 : i32
    %c0_i32_1 = arith.constant 0 : i32
    return %arg1, %c0_i32, %c0_i32_0 : i32, i32, i32
  }
  func.func @transform_11(%arg0: i32, %arg1: i32) -> (i32, i32, i32) {
    %c0_i32 = arith.constant 0 : i32
    %c0_i32_0 = arith.constant 0 : i32
    %c0_i32_1 = arith.constant 0 : i32
    return %arg1, %c0_i32, %c0_i32_0 : i32, i32, i32
  }
  func.func @transform_12(%arg0: i32, %arg1: i32) -> (i32, i32, i32) {
    %c0_i32 = arith.constant 0 : i32
    %c0_i32_0 = arith.constant 0 : i32
    %c0_i32_1 = arith.constant 0 : i32
    return %arg1, %c0_i32, %c0_i32_0 : i32, i32, i32
  }
  func.func @transform_13(%arg0: i32, %arg1: i32) -> (i32, i32, i32) {
    %c0_i32 = arith.constant 0 : i32
    %c0_i32_0 = arith.constant 0 : i32
    %c0_i32_1 = arith.constant 0 : i32
    return %arg0, %c0_i32, %c0_i32_0 : i32, i32, i32
  }
}

</mosaic_0001>

<llo_original>
// kernel: tpu_custom_call.1
$region0: #{tpu_custom_call.1}
  #allocation0 [shape = 'u32[]', space=smem, size = 0x4, offset = 0x4, fixed_abs, tag = 'smem constant byte address 0x4 - core index']
  #allocation1 [shape = 'u32[144,128]{1,0:T(1,128)}', space=vmem, size = 0x12000, scoped, tag = 'internal scratch']
  #allocation2 [shape = 'f32[8,32]{1,0:T(8,128)}', space=vmem, size = 0x1000, scoped, tag = 'scratch operand']
  %s0 = inlined_call_operand.vmem [shape: f32[2,8,32], index: 0, kind: input, shape index: {}]
  %s1 = inlined_call_operand.vmem [shape: f32[2,1,32], index: 1, kind: input, shape index: {}]
  %s2 = inlined_call_operand.vmem [shape: f32[2,1,32], index: 2, kind: input, shape index: {}]
  %s3 = inlined_call_operand.vmem [shape: bf16[2,12,32,8], index: 3, kind: input, shape index: {}]
  %s4 = inlined_call_operand.vmem [shape: f32[2,12,1,8], index: 4, kind: input, shape index: {}]
  %s5 = inlined_call_operand.vmem [shape: bf16[2,4,8,32], index: 5, kind: input, shape index: {}]
  %s6 = inlined_call_operand.vmem [shape: f32[2,1,32], index: 6, kind: input, shape index: {}]
  %s7 = inlined_call_operand.vmem [shape: f32[2,1,32], index: 7, kind: input, shape index: {}]
  %s8 = inlined_call_operand.vmem [shape: f32[2,1,32], index: 8, kind: input, shape index: {}]
  %s9 = inlined_call_operand.vmem [shape: bf16[2,32,64], index: 9, kind: input, shape index: {}]
  %s10 = inlined_call_operand.vmem [shape: f32[2,1,64], index: 10, kind: input, shape index: {}]
  %s11 = inlined_call_operand.vmem [shape: bf16[2,64,32], index: 11, kind: input, shape index: {}]
  %s12 = inlined_call_operand.vmem [shape: f32[2,1,32], index: 12, kind: input, shape index: {}]
  %s13 = inlined_call_operand.hbm [shape: f32[2,8,32], index: 13, kind: output, shape index: {}]
  %s14 = sld [smem:[#allocation0]]
  $region93: #{tpu_custom_call.1} parent=0
    _
  %s16 = ssub.s32 1, %s14
  %s17 = scalar_select 0, %s16, %s14
  $region1: #{tpu_custom_call.1} parent=0
    #allocation3 [shape = 'u8[8192]{0}', space=vmem, size = 0x2000, scoped, tag = 'output window, operand 0']
    #allocation4 [shape = 's32[2]{0}', space=sflag, size = 0x8, scoped, tag = 'scoped memory for tpu_custom_call.1']
    %18 = vsyncpa [#allocation4], 0
    %s19 = scalar_lea.sflag [#allocation4], 1
    %20 = vsyncpa %s19, 0
    loop: start=0, step=1, limit=6
    $region2: #{tpu_custom_call.1} parent=1 // loop_pre_header
      _
    $region3: #{tpu_custom_call.1} parent=1 // loop_header
      %s22 = sphi 0, %s26
      %p23 = scmp.ge.s32.totalorder %s22, 6
      %s29 = sphi 0, %s41
      %s30 = sphi 0, %s37
      %s31 = sphi 0, %s29
      %s32 = sphi 0, %s30
      %s33 = sphi 0, %s31
      %s34 = sphi 0, %s32
      %s44 = sphi 0, %s46
      %s47 = sphi 0, %s44
      %s48 = sphi 0, %s47
      %s64 = sphi 0, %s48
      %s70 = sphi 0, %s72
      %s73 = sphi 0, %s70
      %s74 = sphi 0, %s73
      %s90 = sphi 0, %s74
      %s96 = sphi 0, %s98
      %s99 = sphi 0, %s96
      %s100 = sphi 0, %s99
      %s116 = sphi 0, %s100
      %s122 = sphi 0, %s124
      %s125 = sphi 0, %s122
      %s126 = sphi 0, %s125
      %s142 = sphi 0, %s126
      %s148 = sphi 0, %s150
      %s151 = sphi 0, %s148
      %s152 = sphi 0, %s151
      %s168 = sphi 0, %s152
      %s174 = sphi 0, %s176
      %s177 = sphi 0, %s174
      %s178 = sphi 0, %s177
      %s194 = sphi 0, %s178
      %s200 = sphi 0, %s202
      %s203 = sphi 0, %s200
      %s204 = sphi 0, %s203
      %s220 = sphi 0, %s204
      %s226 = sphi 0, %s228
      %s229 = sphi 0, %s226
      %s230 = sphi 0, %s229
      %s246 = sphi 0, %s230
      %s252 = sphi 0, %s254
      %s255 = sphi 0, %s252
      %s256 = sphi 0, %s255
      %s272 = sphi 0, %s256
      %s278 = sphi 0, %s280
      %s281 = sphi 0, %s278
      %s282 = sphi 0, %s281
      %s298 = sphi 0, %s282
      %s304 = sphi 0, %s306
      %s307 = sphi 0, %s304
      %s308 = sphi 0, %s307
      %s324 = sphi 0, %s308
      %s330 = sphi 0, %s332
      %s333 = sphi 0, %s330
      %s334 = sphi 0, %s333
      %s350 = sphi 0, %s334
      %s356 = sphi 0, %s358
      %s359 = sphi 0, %s356
      %s360 = sphi 0, %s359
      %s376 = sphi 0, %s360
      %s382 = sphi 0, %s384
      %s385 = sphi 0, %s382
      %s386 = sphi 0, %s385
      %s402 = sphi 0, %s386
    $region4: #{tpu_custom_call.1} parent=1 // loop_header_branch
      %25 = sbr.rel (%p23) target = $region8
    $region5: #{tpu_custom_call.1} parent=1 // loop_body
      %s27 = ssub.s32 %s22, 1
      %s28 = ssub.s32 %s22, 2
      %s35 = sadd.s32 1, %s30
      %p36 = scmp.ge.s32.totalorder %s35, 2
      %s37 = scalar_select %p36, 0, %s35
      %s38 = sadd.s32 1, %s29
      %s39 = scalar_select %p36, %s38, %s29
      %p40 = scmp.ge.s32.totalorder %s39, 2
      %s41 = scalar_select %p40, 0, %s39
      %s42 = ssub.s32 %s29, %s41
      %p43 = scmp.eq.s32.totalorder %s42, 0
      %s45 = sadd.s32 %s44, 1
      %s46 = scalar_select %p43, %s44, %s45
      %p49 = pneg %p43
      %p50 = scmp.eq.s32.totalorder %s22, 3
      %p51 = por %p49, %p50
      %p52 = scmp.ne.s32.totalorder %s44, %s47
      %p53 = scmp.eq.s32.totalorder %s22, 0
      %p54 = por %p52, %p53
      %p55 = scmp.ne.s32.totalorder %s44, %s47
      %p56 = scmp.eq.s32.totalorder %s27, 3
      %p57 = por %p55, %p56
      %p58 = scmp.ne.s32.totalorder %s47, %s48
      %p59 = scmp.eq.s32.totalorder %s27, 0
      %p60 = por %p58, %p59
      %p61 = scmp.ne.s32.totalorder %s47, %s48
      %p62 = scmp.eq.s32.totalorder %s28, 3
      %p63 = por %p61, %p62
      %p65 = scmp.ne.s32.totalorder %s48, %s64
      %p66 = scmp.eq.s32.totalorder %s28, 0
      %p67 = por %p65, %p66
      %s68 = ssub.s32 %s30, %s37
      %p69 = scmp.eq.s32.totalorder %s68, 0
      %s71 = sadd.s32 %s70, 1
      %s72 = scalar_select %p69, %s70, %s71
      %p75 = pneg %p69
      %p76 = scmp.eq.s32.totalorder %s22, 3
      %p77 = por %p75, %p76
      %p78 = scmp.ne.s32.totalorder %s70, %s73
      %p79 = scmp.eq.s32.totalorder %s22, 0
      %p80 = por %p78, %p79
      %p81 = scmp.ne.s32.totalorder %s70, %s73
      %p82 = scmp.eq.s32.totalorder %s27, 3
      %p83 = por %p81, %p82
      %p84 = scmp.ne.s32.totalorder %s73, %s74
      %p85 = scmp.eq.s32.totalorder %s27, 0
      %p86 = por %p84, %p85
      %p87 = scmp.ne.s32.totalorder %s73, %s74
      %p88 = scmp.eq.s32.totalorder %s28, 3
      %p89 = por %p87, %p88
      %p91 = scmp.ne.s32.totalorder %s74, %s90
      %p92 = scmp.eq.s32.totalorder %s28, 0
      %p93 = por %p91, %p92
      %s94 = ssub.s32 %s30, %s37
      %p95 = scmp.eq.s32.totalorder %s94, 0
      %s97 = sadd.s32 %s96, 1
      %s98 = scalar_select %p95, %s96, %s97
      %p101 = pneg %p95
      %p102 = scmp.eq.s32.totalorder %s22, 3
      %p103 = por %p101, %p102
      %p104 = scmp.ne.s32.totalorder %s96, %s99
      %p105 = scmp.eq.s32.totalorder %s22, 0
      %p106 = por %p104, %p105
      %p107 = scmp.ne.s32.totalorder %s96, %s99
      %p108 = scmp.eq.s32.totalorder %s27, 3
      %p109 = por %p107, %p108
      %p110 = scmp.ne.s32.totalorder %s99, %s100
      %p111 = scmp.eq.s32.totalorder %s27, 0
      %p112 = por %p110, %p111
      %p113 = scmp.ne.s32.totalorder %s99, %s100
      %p114 = scmp.eq.s32.totalorder %s28, 3
      %p115 = por %p113, %p114
      %p117 = scmp.ne.s32.totalorder %s100, %s116
      %p118 = scmp.eq.s32.totalorder %s28, 0
      %p119 = por %p117, %p118
      %s120 = ssub.s32 %s30, %s37
      %p121 = scmp.eq.s32.totalorder %s120, 0
      %s123 = sadd.s32 %s122, 1
      %s124 = scalar_select %p121, %s122, %s123
      %p127 = pneg %p121
      %p128 = scmp.eq.s32.totalorder %s22, 3
      %p129 = por %p127, %p128
      %p130 = scmp.ne.s32.totalorder %s122, %s125
      %p131 = scmp.eq.s32.totalorder %s22, 0
      %p132 = por %p130, %p131
      %p133 = scmp.ne.s32.totalorder %s122, %s125
      %p134 = scmp.eq.s32.totalorder %s27, 3
      %p135 = por %p133, %p134
      %p136 = scmp.ne.s32.totalorder %s125, %s126
      %p137 = scmp.eq.s32.totalorder %s27, 0
      %p138 = por %p136, %p137
      %p139 = scmp.ne.s32.totalorder %s125, %s126
      %p140 = scmp.eq.s32.totalorder %s28, 3
      %p141 = por %p139, %p140
      %p143 = scmp.ne.s32.totalorder %s126, %s142
      %p144 = scmp.eq.s32.totalorder %s28, 0
      %p145 = por %p143, %p144
      %s146 = ssub.s32 %s30, %s37
      %p147 = scmp.eq.s32.totalorder %s146, 0
      %s149 = sadd.s32 %s148, 1
      %s150 = scalar_select %p147, %s148, %s149
      %p153 = pneg %p147
      %p154 = scmp.eq.s32.totalorder %s22, 3
      %p155 = por %p153, %p154
      %p156 = scmp.ne.s32.totalorder %s148, %s151
      %p157 = scmp.eq.s32.totalorder %s22, 0
      %p158 = por %p156, %p157
      %p159 = scmp.ne.s32.totalorder %s148, %s151
      %p160 = scmp.eq.s32.totalorder %s27, 3
      %p161 = por %p159, %p160
      %p162 = scmp.ne.s32.totalorder %s151, %s152
      %p163 = scmp.eq.s32.totalorder %s27, 0
      %p164 = por %p162, %p163
      %p165 = scmp.ne.s32.totalorder %s151, %s152
      %p166 = scmp.eq.s32.totalorder %s28, 3
      %p167 = por %p165, %p166
      %p169 = scmp.ne.s32.totalorder %s152, %s168
      %p170 = scmp.eq.s32.totalorder %s28, 0
      %p171 = por %p169, %p170
      %s172 = ssub.s32 %s30, %s37
      %p173 = scmp.eq.s32.totalorder %s172, 0
      %s175 = sadd.s32 %s174, 1
      %s176 = scalar_select %p173, %s174, %s175
      %p179 = pneg %p173
      %p180 = scmp.eq.s32.totalorder %s22, 3
      %p181 = por %p179, %p180
      %p182 = scmp.ne.s32.totalorder %s174, %s177
      %p183 = scmp.eq.s32.totalorder %s22, 0
      %p184 = por %p182, %p183
      %p185 = scmp.ne.s32.totalorder %s174, %s177
      %p186 = scmp.eq.s32.totalorder %s27, 3
      %p187 = por %p185, %p186
      %p188 = scmp.ne.s32.totalorder %s177, %s178
      %p189 = scmp.eq.s32.totalorder %s27, 0
      %p190 = por %p188, %p189
      %p191 = scmp.ne.s32.totalorder %s177, %s178
      %p192 = scmp.eq.s32.totalorder %s28, 3
      %p193 = por %p191, %p192
      %p195 = scmp.ne.s32.totalorder %s178, %s194
      %p196 = scmp.eq.s32.totalorder %s28, 0
      %p197 = por %p195, %p196
      %s198 = ssub.s32 %s30, %s37
      %p199 = scmp.eq.s32.totalorder %s198, 0
      %s201 = sadd.s32 %s200, 1
      %s202 = scalar_select %p199, %s200, %s201
      %p205 = pneg %p199
      %p206 = scmp.eq.s32.totalorder %s22, 3
      %p207 = por %p205, %p206
      %p208 = scmp.ne.s32.totalorder %s200, %s203
      %p209 = scmp.eq.s32.totalorder %s22, 0
      %p210 = por %p208, %p209
      %p211 = scmp.ne.s32.totalorder %s200, %s203
      %p212 = scmp.eq.s32.totalorder %s27, 3
      %p213 = por %p211, %p212
      %p214 = scmp.ne.s32.totalorder %s203, %s204
      %p215 = scmp.eq.s32.totalorder %s27, 0
      %p216 = por %p214, %p215
      %p217 = scmp.ne.s32.totalorder %s203, %s204
      %p218 = scmp.eq.s32.totalorder %s28, 3
      %p219 = por %p217, %p218
      %p221 = scmp.ne.s32.totalorder %s204, %s220
      %p222 = scmp.eq.s32.totalorder %s28, 0
      %p223 = por %p221, %p222
      %s224 = ssub.s32 %s30, %s37
      %p225 = scmp.eq.s32.totalorder %s224, 0
      %s227 = sadd.s32 %s226, 1
      %s228 = scalar_select %p225, %s226, %s227
      %p231 = pneg %p225
      %p232 = scmp.eq.s32.totalorder %s22, 3
      %p233 = por %p231, %p232
      %p234 = scmp.ne.s32.totalorder %s226, %s229
      %p235 = scmp.eq.s32.totalorder %s22, 0
      %p236 = por %p234, %p235
      %p237 = scmp.ne.s32.totalorder %s226, %s229
      %p238 = scmp.eq.s32.totalorder %s27, 3
      %p239 = por %p237, %p238
      %p240 = scmp.ne.s32.totalorder %s229, %s230
      %p241 = scmp.eq.s32.totalorder %s27, 0
      %p242 = por %p240, %p241
      %p243 = scmp.ne.s32.totalorder %s229, %s230
      %p244 = scmp.eq.s32.totalorder %s28, 3
      %p245 = por %p243, %p244
      %p247 = scmp.ne.s32.totalorder %s230, %s246
      %p248 = scmp.eq.s32.totalorder %s28, 0
      %p249 = por %p247, %p248
      %s250 = ssub.s32 %s30, %s37
      %p251 = scmp.eq.s32.totalorder %s250, 0
      %s253 = sadd.s32 %s252, 1
      %s254 = scalar_select %p251, %s252, %s253
      %p257 = pneg %p251
      %p258 = scmp.eq.s32.totalorder %s22, 3
      %p259 = por %p257, %p258
      %p260 = scmp.ne.s32.totalorder %s252, %s255
      %p261 = scmp.eq.s32.totalorder %s22, 0
      %p262 = por %p260, %p261
      %p263 = scmp.ne.s32.totalorder %s252, %s255
      %p264 = scmp.eq.s32.totalorder %s27, 3
      %p265 = por %p263, %p264
      %p266 = scmp.ne.s32.totalorder %s255, %s256
      %p267 = scmp.eq.s32.totalorder %s27, 0
      %p268 = por %p266, %p267
      %p269 = scmp.ne.s32.totalorder %s255, %s256
      %p270 = scmp.eq.s32.totalorder %s28, 3
      %p271 = por %p269, %p270
      %p273 = scmp.ne.s32.totalorder %s256, %s272
      %p274 = scmp.eq.s32.totalorder %s28, 0
      %p275 = por %p273, %p274
      %s276 = ssub.s32 %s30, %s37
      %p277 = scmp.eq.s32.totalorder %s276, 0
      %s279 = sadd.s32 %s278, 1
      %s280 = scalar_select %p277, %s278, %s279
      %p283 = pneg %p277
      %p284 = scmp.eq.s32.totalorder %s22, 3
      %p285 = por %p283, %p284
      %p286 = scmp.ne.s32.totalorder %s278, %s281
      %p287 = scmp.eq.s32.totalorder %s22, 0
      %p288 = por %p286, %p287
      %p289 = scmp.ne.s32.totalorder %s278, %s281
      %p290 = scmp.eq.s32.totalorder %s27, 3
      %p291 = por %p289, %p290
      %p292 = scmp.ne.s32.totalorder %s281, %s282
      %p293 = scmp.eq.s32.totalorder %s27, 0
      %p294 = por %p292, %p293
      %p295 = scmp.ne.s32.totalorder %s281, %s282
      %p296 = scmp.eq.s32.totalorder %s28, 3
      %p297 = por %p295, %p296
      %p299 = scmp.ne.s32.totalorder %s282, %s298
      %p300 = scmp.eq.s32.totalorder %s28, 0
      %p301 = por %p299, %p300
      %s302 = ssub.s32 %s30, %s37
      %p303 = scmp.eq.s32.totalorder %s302, 0
      %s305 = sadd.s32 %s304, 1
      %s306 = scalar_select %p303, %s304, %s305
      %p309 = pneg %p303
      %p310 = scmp.eq.s32.totalorder %s22, 3
      %p311 = por %p309, %p310
      %p312 = scmp.ne.s32.totalorder %s304, %s307
      %p313 = scmp.eq.s32.totalorder %s22, 0
      %p314 = por %p312, %p313
      %p315 = scmp.ne.s32.totalorder %s304, %s307
      %p316 = scmp.eq.s32.totalorder %s27, 3
      %p317 = por %p315, %p316
      %p318 = scmp.ne.s32.totalorder %s307, %s308
      %p319 = scmp.eq.s32.totalorder %s27, 0
      %p320 = por %p318, %p319
      %p321 = scmp.ne.s32.totalorder %s307, %s308
      %p322 = scmp.eq.s32.totalorder %s28, 3
      %p323 = por %p321, %p322
      %p325 = scmp.ne.s32.totalorder %s308, %s324
      %p326 = scmp.eq.s32.totalorder %s28, 0
      %p327 = por %p325, %p326
      %s328 = ssub.s32 %s30, %s37
      %p329 = scmp.eq.s32.totalorder %s328, 0
      %s331 = sadd.s32 %s330, 1
      %s332 = scalar_select %p329, %s330, %s331
      %p335 = pneg %p329
      %p336 = scmp.eq.s32.totalorder %s22, 3
      %p337 = por %p335, %p336
      %p338 = scmp.ne.s32.totalorder %s330, %s333
      %p339 = scmp.eq.s32.totalorder %s22, 0
      %p340 = por %p338, %p339
      %p341 = scmp.ne.s32.totalorder %s330, %s333
      %p342 = scmp.eq.s32.totalorder %s27, 3
      %p343 = por %p341, %p342
      %p344 = scmp.ne.s32.totalorder %s333, %s334
      %p345 = scmp.eq.s32.totalorder %s27, 0
      %p346 = por %p344, %p345
      %p347 = scmp.ne.s32.totalorder %s333, %s334
      %p348 = scmp.eq.s32.totalorder %s28, 3
      %p349 = por %p347, %p348
      %p351 = scmp.ne.s32.totalorder %s334, %s350
      %p352 = scmp.eq.s32.totalorder %s28, 0
      %p353 = por %p351, %p352
      %s354 = ssub.s32 %s30, %s37
      %p355 = scmp.eq.s32.totalorder %s354, 0
      %s357 = sadd.s32 %s356, 1
      %s358 = scalar_select %p355, %s356, %s357
      %p361 = pneg %p355
      %p362 = scmp.eq.s32.totalorder %s22, 3
      %p363 = por %p361, %p362
      %p364 = scmp.ne.s32.totalorder %s356, %s359
      %p365 = scmp.eq.s32.totalorder %s22, 0
      %p366 = por %p364, %p365
      %p367 = scmp.ne.s32.totalorder %s356, %s359
      %p368 = scmp.eq.s32.totalorder %s27, 3
      %p369 = por %p367, %p368
      %p370 = scmp.ne.s32.totalorder %s359, %s360
      %p371 = scmp.eq.s32.totalorder %s27, 0
      %p372 = por %p370, %p371
      %p373 = scmp.ne.s32.totalorder %s359, %s360
      %p374 = scmp.eq.s32.totalorder %s28, 3
      %p375 = por %p373, %p374
      %p377 = scmp.ne.s32.totalorder %s360, %s376
      %p378 = scmp.eq.s32.totalorder %s28, 0
      %p379 = por %p377, %p378
      %s380 = ssub.s32 %s29, %s41
      %p381 = scmp.eq.s32.totalorder %s380, 0
      %s383 = sadd.s32 %s382, 1
      %s384 = scalar_select %p381, %s382, %s383
      %p387 = pneg %p381
      %p388 = scmp.eq.s32.totalorder %s22, 3
      %p389 = por %p387, %p388
      %p390 = scmp.ne.s32.totalorder %s382, %s385
      %p391 = scmp.eq.s32.totalorder %s22, 0
      %p392 = por %p390, %p391
      %p393 = scmp.ne.s32.totalorder %s382, %s385
      %p394 = scmp.eq.s32.totalorder %s27, 3
      %p395 = por %p393, %p394
      %p396 = scmp.ne.s32.totalorder %s385, %s386
      %p397 = scmp.eq.s32.totalorder %s27, 0
      %p398 = por %p396, %p397
      %p399 = scmp.ne.s32.totalorder %s385, %s386
      %p400 = scmp.eq.s32.totalorder %s28, 3
      %p401 = por %p399, %p400
      %p403 = scmp.ne.s32.totalorder %s386, %s402
      %p404 = scmp.eq.s32.totalorder %s28, 0
      %p405 = por %p403, %p404
      %p406 = scmp.le.s32.totalorder 1, %s22
      %p407 = scmp.lt.s32.totalorder %s22, 5
      %p408 = pnand %p406, %p407
      %p409 = pneg %p408
      // Predicated region
      $region9: #{tpu_custom_call.1} parent=5 // pred_check
        _
      $region10: #{tpu_custom_call.1} parent=5 // pred_check_branch
        %411 = sbr.rel (%p408) target = $region12
      $region11: #{tpu_custom_call.1} parent=5 // pred_region
        %s412 = ssub.s32 %s22, 1
      $region12: #{tpu_custom_call.1} parent=5 // pred_fallthru
        _
      %p413 = scmp.lt.s32.totalorder %s22, 4
      // Predicated region
      $region13: #{tpu_custom_call.1} parent=5 // pred_check
        %p414 = pneg %p413
      $region14: #{tpu_custom_call.1} parent=5 // pred_check_branch
        %416 = sbr.rel (%p414) target = $region16
      $region15: #{tpu_custom_call.1} parent=5 // pred_region
        // Predicated region
        $region17: #{tpu_custom_call.1} parent=15 // pred_check
          %p417 = pneg %p54
        $region18: #{tpu_custom_call.1} parent=15 // pred_check_branch
          %419 = sbr.rel (%p417) target = $region20
        $region19: #{tpu_custom_call.1} parent=15 // pred_region
          %p420 = scmp.lt.s32.totalorder %s29, 1
          %s421 = scalar_select %p420, %s29, 1
          %s422 = smul.addr %s421, 8
          %s423 = scalar_lea.vmem %s0, %s422
        $region20: #{tpu_custom_call.1} parent=15 // pred_fallthru
          _
        // Predicated region
        $region21: #{tpu_custom_call.1} parent=15 // pred_check
          %p424 = pneg %p80
        $region22: #{tpu_custom_call.1} parent=15 // pred_check_branch
          %426 = sbr.rel (%p424) target = $region24
        $region23: #{tpu_custom_call.1} parent=15 // pred_region
          %p427 = scmp.lt.s32.totalorder %s30, 1
          %s428 = scalar_select %p427, %s30, 1
          %s429 = scalar_lea.vmem %s1, %s428
        $region24: #{tpu_custom_call.1} parent=15 // pred_fallthru
          _
        // Predicated region
        $region25: #{tpu_custom_call.1} parent=15 // pred_check
          %p430 = pneg %p106
        $region26: #{tpu_custom_call.1} parent=15 // pred_check_branch
          %432 = sbr.rel (%p430) target = $region28
        $region27: #{tpu_custom_call.1} parent=15 // pred_region
          %p433 = scmp.lt.s32.totalorder %s30, 1
          %s434 = scalar_select %p433, %s30, 1
          %s435 = scalar_lea.vmem %s2, %s434
        $region28: #{tpu_custom_call.1} parent=15 // pred_fallthru
          _
        // Predicated region
        $region29: #{tpu_custom_call.1} parent=15 // pred_check
          %p436 = pneg %p132
        $region30: #{tpu_custom_call.1} parent=15 // pred_check_branch
          %438 = sbr.rel (%p436) target = $region32
        $region31: #{tpu_custom_call.1} parent=15 // pred_region
          %p439 = scmp.lt.s32.totalorder %s30, 1
          %s440 = scalar_select %p439, %s30, 1
          %s441 = smul.addr %s440, 48
          %s442 = smul.addr %s441, 4
          %s443 = scalar_lea.vmem %s3, %s442
        $region32: #{tpu_custom_call.1} parent=15 // pred_fallthru
          _
        // Predicated region
        $region33: #{tpu_custom_call.1} parent=15 // pred_check
          %p444 = pneg %p158
        $region34: #{tpu_custom_call.1} parent=15 // pred_check_branch
          %446 = sbr.rel (%p444) target = $region36
        $region35: #{tpu_custom_call.1} parent=15 // pred_region
          %p447 = scmp.lt.s32.totalorder %s30, 1
          %s448 = scalar_select %p447, %s30, 1
          %s449 = smul.addr %s448, 12
          %s450 = scalar_lea.vmem %s4, %s449
        $region36: #{tpu_custom_call.1} parent=15 // pred_fallthru
          _
        // Predicated region
        $region37: #{tpu_custom_call.1} parent=15 // pred_check
          %p451 = pneg %p184
        $region38: #{tpu_custom_call.1} parent=15 // pred_check_branch
          %453 = sbr.rel (%p451) target = $region40
        $region39: #{tpu_custom_call.1} parent=15 // pred_region
          %p454 = scmp.lt.s32.totalorder %s30, 1
          %s455 = scalar_select %p454, %s30, 1
          %s456 = smul.addr %s455, 4
          %s457 = smul.addr %s456, 4
          %s458 = scalar_lea.vmem %s5, %s457
        $region40: #{tpu_custom_call.1} parent=15 // pred_fallthru
          _
        // Predicated region
        $region41: #{tpu_custom_call.1} parent=15 // pred_check
          %p459 = pneg %p210
        $region42: #{tpu_custom_call.1} parent=15 // pred_check_branch
          %461 = sbr.rel (%p459) target = $region44
        $region43: #{tpu_custom_call.1} parent=15 // pred_region
          %p462 = scmp.lt.s32.totalorder %s30, 1
          %s463 = scalar_select %p462, %s30, 1
          %s464 = scalar_lea.vmem %s6, %s463
        $region44: #{tpu_custom_call.1} parent=15 // pred_fallthru
          _
        // Predicated region
        $region45: #{tpu_custom_call.1} parent=15 // pred_check
          %p465 = pneg %p236
        $region46: #{tpu_custom_call.1} parent=15 // pred_check_branch
          %467 = sbr.rel (%p465) target = $region48
        $region47: #{tpu_custom_call.1} parent=15 // pred_region
          %p468 = scmp.lt.s32.totalorder %s30, 1
          %s469 = scalar_select %p468, %s30, 1
          %s470 = scalar_lea.vmem %s7, %s469
        $region48: #{tpu_custom_call.1} parent=15 // pred_fallthru
          _
        // Predicated region
        $region49: #{tpu_custom_call.1} parent=15 // pred_check
          %p471 = pneg %p262
        $region50: #{tpu_custom_call.1} parent=15 // pred_check_branch
          %473 = sbr.rel (%p471) target = $region52
        $region51: #{tpu_custom_call.1} parent=15 // pred_region
          %p474 = scmp.lt.s32.totalorder %s30, 1
          %s475 = scalar_select %p474, %s30, 1
          %s476 = scalar_lea.vmem %s8, %s475
        $region52: #{tpu_custom_call.1} parent=15 // pred_fallthru
          _
        // Predicated region
        $region53: #{tpu_custom_call.1} parent=15 // pred_check
          %p477 = pneg %p288
        $region54: #{tpu_custom_call.1} parent=15 // pred_check_branch
          %479 = sbr.rel (%p477) target = $region56
        $region55: #{tpu_custom_call.1} parent=15 // pred_region
          %p480 = scmp.lt.s32.totalorder %s30, 1
          %s481 = scalar_select %p480, %s30, 1
          %s482 = smul.addr %s481, 4
          %s483 = smul.addr %s482, 4
          %s484 = scalar_lea.vmem %s9, %s483
        $region56: #{tpu_custom_call.1} parent=15 // pred_fallthru
          _
        // Predicated region
        $region57: #{tpu_custom_call.1} parent=15 // pred_check
          %p485 = pneg %p314
        $region58: #{tpu_custom_call.1} parent=15 // pred_check_branch
          %487 = sbr.rel (%p485) target = $region60
        $region59: #{tpu_custom_call.1} parent=15 // pred_region
          %p488 = scmp.lt.s32.totalorder %s30, 1
          %s489 = scalar_select %p488, %s30, 1
          %s490 = scalar_lea.vmem %s10, %s489
        $region60: #{tpu_custom_call.1} parent=15 // pred_fallthru
          _
        // Predicated region
        $region61: #{tpu_custom_call.1} parent=15 // pred_check
          %p491 = pneg %p340
        $region62: #{tpu_custom_call.1} parent=15 // pred_check_branch
          %493 = sbr.rel (%p491) target = $region64
        $region63: #{tpu_custom_call.1} parent=15 // pred_region
          %p494 = scmp.lt.s32.totalorder %s30, 1
          %s495 = scalar_select %p494, %s30, 1
          %s496 = smul.addr %s495, 8
          %s497 = smul.addr %s496, 4
          %s498 = scalar_lea.vmem %s11, %s497
        $region64: #{tpu_custom_call.1} parent=15 // pred_fallthru
          _
        // Predicated region
        $region65: #{tpu_custom_call.1} parent=15 // pred_check
          %p499 = pneg %p366
        $region66: #{tpu_custom_call.1} parent=15 // pred_check_branch
          %501 = sbr.rel (%p499) target = $region68
        $region67: #{tpu_custom_call.1} parent=15 // pred_region
          %p502 = scmp.lt.s32.totalorder %s30, 1
          %s503 = scalar_select %p502, %s30, 1
          %s504 = scalar_lea.vmem %s12, %s503
        $region68: #{tpu_custom_call.1} parent=15 // pred_fallthru
          _
      $region16: #{tpu_custom_call.1} parent=5 // pred_fallthru
        _
      %p505 = scmp.le.s32.totalorder 1, %s22
      %p506 = scmp.lt.s32.totalorder %s22, 5
      %p507 = pnand %p505, %p506
      %p508 = pneg %p507
      // Predicated region
      $region69: #{tpu_custom_call.1} parent=5 // pred_check
        _
      $region70: #{tpu_custom_call.1} parent=5 // pred_check_branch
        %510 = sbr.rel (%p507) target = $region72
      $region71: #{tpu_custom_call.1} parent=5 // pred_region
        %s511 = ssub.s32 %s22, 1
        %p512 = scmp.lt.s32.totalorder %s31, 1
        %s513 = scalar_select %p512, %s31, 1
        %s514 = smul.addr %s513, 8
        %s515 = scalar_lea.vmem %s0, %s514
        %p516 = pneg %p60
        %p517 = pneg %p57
        %p518 = scmp.lt.s32.totalorder %s32, 1
        %s519 = scalar_select %p518, %s32, 1
        %s520 = scalar_lea.vmem %s1, %s519
        %p521 = pneg %p86
        %p522 = pneg %p83
        %p523 = scmp.lt.s32.totalorder %s32, 1
        %s524 = scalar_select %p523, %s32, 1
        %s525 = scalar_lea.vmem %s2, %s524
        %p526 = pneg %p112
        %p527 = pneg %p109
        %p528 = scmp.lt.s32.totalorder %s32, 1
        %s529 = scalar_select %p528, %s32, 1
        %s530 = smul.addr %s529, 48
        %s531 = smul.addr %s530, 4
        %s532 = scalar_lea.vmem %s3, %s531
        %p533 = pneg %p138
        %p534 = pneg %p135
        %p535 = scmp.lt.s32.totalorder %s32, 1
        %s536 = scalar_select %p535, %s32, 1
        %s537 = smul.addr %s536, 12
        %s538 = scalar_lea.vmem %s4, %s537
        %p539 = pneg %p164
        %p540 = pneg %p161
        %p541 = scmp.lt.s32.totalorder %s32, 1
        %s542 = scalar_select %p541, %s32, 1
        %s543 = smul.addr %s542, 4
        %s544 = smul.addr %s543, 4
        %s545 = scalar_lea.vmem %s5, %s544
        %p546 = pneg %p190
        %p547 = pneg %p187
        %p548 = scmp.lt.s32.totalorder %s32, 1
        %s549 = scalar_select %p548, %s32, 1
        %s550 = scalar_lea.vmem %s6, %s549
        %p551 = pneg %p216
        %p552 = pneg %p213
        %p553 = scmp.lt.s32.totalorder %s32, 1
        %s554 = scalar_select %p553, %s32, 1
        %s555 = scalar_lea.vmem %s7, %s554
        %p556 = pneg %p242
        %p557 = pneg %p239
        %p558 = scmp.lt.s32.totalorder %s32, 1
        %s559 = scalar_select %p558, %s32, 1
        %s560 = scalar_lea.vmem %s8, %s559
        %p561 = pneg %p268
        %p562 = pneg %p265
        %p563 = scmp.lt.s32.totalorder %s32, 1
        %s564 = scalar_select %p563, %s32, 1
        %s565 = smul.addr %s564, 4
        %s566 = smul.addr %s565, 4
        %s567 = scalar_lea.vmem %s9, %s566
        %p568 = pneg %p294
        %p569 = pneg %p291
        %p570 = scmp.lt.s32.totalorder %s32, 1
        %s571 = scalar_select %p570, %s32, 1
        %s572 = scalar_lea.vmem %s10, %s571
        %p573 = pneg %p320
        %p574 = pneg %p317
        %p575 = scmp.lt.s32.totalorder %s32, 1
        %s576 = scalar_select %p575, %s32, 1
        %s577 = smul.addr %s576, 8
        %s578 = smul.addr %s577, 4
        %s579 = scalar_lea.vmem %s11, %s578
        %p580 = pneg %p346
        %p581 = pneg %p343
        %p582 = scmp.lt.s32.totalorder %s32, 1
        %s583 = scalar_select %p582, %s32, 1
        %s584 = scalar_lea.vmem %s12, %s583
        %p585 = pneg %p372
        %p586 = pneg %p369
        %p587 = pneg %p398
        %p588 = pneg %p395
        %s589 = sand.u32 %s385, 1
        %s590 = scalar_lea.sflag [#allocation4], %s589
        %s591 = sand.u32 %s385, 1
        %s592 = smul.addr %s591, 8
        %s593 = scalar_lea.vmem [#allocation3], %s592
        %p594 = scmp.lt.s32.totalorder %s31, 1
        %s595 = scalar_select %p594, %s31, 1
        %s596 = smul.addr %s595, 8
        %s597 = scalar_lea.vmem %s0, %s596
        %p598 = scmp.lt.s32.totalorder %s32, 1
        %s599 = scalar_select %p598, %s32, 1
        %s600 = scalar_lea.vmem %s1, %s599
        %p601 = scmp.lt.s32.totalorder %s32, 1
        %s602 = scalar_select %p601, %s32, 1
        %s603 = scalar_lea.vmem %s2, %s602
        %p604 = scmp.lt.s32.totalorder %s32, 1
        %s605 = scalar_select %p604, %s32, 1
        %s606 = smul.addr %s605, 48
        %s607 = smul.addr %s606, 4
        %s608 = scalar_lea.vmem %s3, %s607
        %p609 = scmp.lt.s32.totalorder %s32, 1
        %s610 = scalar_select %p609, %s32, 1
        %s611 = smul.addr %s610, 12
        %s612 = scalar_lea.vmem %s4, %s611
        %p613 = scmp.lt.s32.totalorder %s32, 1
        %s614 = scalar_select %p613, %s32, 1
        %s615 = smul.addr %s614, 4
        %s616 = smul.addr %s615, 4
        %s617 = scalar_lea.vmem %s5, %s616
        %p618 = scmp.lt.s32.totalorder %s32, 1
        %s619 = scalar_select %p618, %s32, 1
        %s620 = scalar_lea.vmem %s6, %s619
        %p621 = scmp.lt.s32.totalorder %s32, 1
        %s622 = scalar_select %p621, %s32, 1
        %s623 = scalar_lea.vmem %s7, %s622
        %p624 = scmp.lt.s32.totalorder %s32, 1
        %s625 = scalar_select %p624, %s32, 1
        %s626 = scalar_lea.vmem %s8, %s625
        %p627 = scmp.lt.s32.totalorder %s32, 1
        %s628 = scalar_select %p627, %s32, 1
        %s629 = smul.addr %s628, 4
        %s630 = smul.addr %s629, 4
        %s631 = scalar_lea.vmem %s9, %s630
        %p632 = scmp.lt.s32.totalorder %s32, 1
        %s633 = scalar_select %p632, %s32, 1
        %s634 = scalar_lea.vmem %s10, %s633
        %p635 = scmp.lt.s32.totalorder %s32, 1
        %s636 = scalar_select %p635, %s32, 1
        %s637 = smul.addr %s636, 8
        %s638 = smul.addr %s637, 4
        %s639 = scalar_lea.vmem %s11, %s638
        %p640 = scmp.lt.s32.totalorder %s32, 1
        %s641 = scalar_select %p640, %s32, 1
        %s642 = scalar_lea.vmem %s12, %s641
        %p644 = scmp.eq.s32.totalorder %s32, 0
        // Predicated region
        $region73: #{tpu_custom_call.1} parent=71 // pred_check
          %p645 = pneg %p644
        $region74: #{tpu_custom_call.1} parent=71 // pred_check_branch
          %647 = sbr.rel (%p645) target = $region76
        $region75: #{tpu_custom_call.1} parent=71 // pred_region
          %v648 = vld [vmem:[%s597] sm:$0xff]
          %vm649 = vcmask 261120
          %650 = vst.msk [vmem:[#allocation2] sm:$0xff] %vm649, %v648
        $region76: #{tpu_custom_call.1} parent=71 // pred_fallthru
          _
        %v651 = vld [vmem:[#allocation2] sm:$0xff]
        %v652 = vld [vmem:[%s600] sm:$0x1]
        %v653 = vld [vmem:[%s603] sm:$0x1]
        %vm654 = vcmask 261120
        %v655 = vsel %vm654, %v651, 0.0
        %656 = vadd.xlane.f32.xlu0 %v655
        %v657 = vpop.xlane.xlu0 %656
        %v658 = vrcp.pop 32.0
        %v659 = vmul.f32 %v657, %v658
        %v660 = vsub.f32 %v651, %v659
        %v661 = vmul.f32 %v660, %v660
        %v662 = vsel %vm654, %v661, 0.0
        %663 = vadd.xlane.f32.xlu0 %v662
        %v664 = vpop.xlane.xlu0 %663
        %v665 = vmul.f32 %v664, %v658
        %v666 = vadd.f32 %v665, 1e-07
        %v667 = vrsqrt.pop %v666
        %v668 = vmul.f32 %v660, %v667
        %v670 = vlaneseq
        %v671 = vshrl.u32 %v670, 7
        %v672 = vsub.s32 0, %v671
        %v673 = vrot.slane %v652, %v672
        %v675 = vmul.f32 %v668, %v673
        %v677 = vlaneseq
        %v678 = vshrl.u32 %v677, 7
        %v679 = vsub.s32 0, %v678
        %v680 = vrot.slane %v653, %v679
        %v682 = vadd.f32 %v675, %v680
        %v683 = vpack.c.bf16 %v682, %v682
        %v684 = vld [vmem:[%s608] sm:$0xf]
        %v685 = vld [vmem:[%s608 + $0x4] sm:$0xf]
        %v686 = vld [vmem:[%s608 + $0x8] sm:$0xf]
        %v687 = vld [vmem:[%s608 + $0xc] sm:$0xf]
        %v688 = vld [vmem:[%s608 + $0x10] sm:$0xf]
        %v689 = vld [vmem:[%s608 + $0x14] sm:$0xf]
        %v690 = vld [vmem:[%s608 + $0x18] sm:$0xf]
        %v691 = vld [vmem:[%s608 + $0x1c] sm:$0xf]
        %v692 = vld [vmem:[%s608 + $0x20] sm:$0xf]
        %v693 = vld [vmem:[%s608 + $0x24] sm:$0xf]
        %v694 = vld [vmem:[%s608 + $0x28] sm:$0xf]
        %v695 = vld [vmem:[%s608 + $0x2c] sm:$0xf]
        %v696 = vld [vmem:[%s608 + $0x30] sm:$0xf]
        %v697 = vld [vmem:[%s608 + $0x34] sm:$0xf]
        %v698 = vld [vmem:[%s608 + $0x38] sm:$0xf]
        %v699 = vld [vmem:[%s608 + $0x3c] sm:$0xf]
        %v700 = vld [vmem:[%s608 + $0x40] sm:$0xf]
        %v701 = vld [vmem:[%s608 + $0x44] sm:$0xf]
        %v702 = vld [vmem:[%s608 + $0x48] sm:$0xf]
        %v703 = vld [vmem:[%s608 + $0x4c] sm:$0xf]
        %v704 = vld [vmem:[%s608 + $0x50] sm:$0xf]
        %v705 = vld [vmem:[%s608 + $0x54] sm:$0xf]
        %v706 = vld [vmem:[%s608 + $0x58] sm:$0xf]
        %v707 = vld [vmem:[%s608 + $0x5c] sm:$0xf]
        %v708 = vld [vmem:[%s608 + $0x60] sm:$0xf]
        %v709 = vld [vmem:[%s608 + $0x64] sm:$0xf]
        %v710 = vld [vmem:[%s608 + $0x68] sm:$0xf]
        %v711 = vld [vmem:[%s608 + $0x6c] sm:$0xf]
        %v712 = vld [vmem:[%s608 + $0x70] sm:$0xf]
        %v713 = vld [vmem:[%s608 + $0x74] sm:$0xf]
        %v714 = vld [vmem:[%s608 + $0x78] sm:$0xf]
        %v715 = vld [vmem:[%s608 + $0x7c] sm:$0xf]
        %v716 = vld [vmem:[%s608 + $0x80] sm:$0xf]
        %v717 = vld [vmem:[%s608 + $0x84] sm:$0xf]
        %v718 = vld [vmem:[%s608 + $0x88] sm:$0xf]
        %v719 = vld [vmem:[%s608 + $0x8c] sm:$0xf]
        %v720 = vld [vmem:[%s608 + $0x90] sm:$0xf]
        %v721 = vld [vmem:[%s608 + $0x94] sm:$0xf]
        %v722 = vld [vmem:[%s608 + $0x98] sm:$0xf]
        %v723 = vld [vmem:[%s608 + $0x9c] sm:$0xf]
        %v724 = vld [vmem:[%s608 + $0xa0] sm:$0xf]
        %v725 = vld [vmem:[%s608 + $0xa4] sm:$0xf]
        %v726 = vld [vmem:[%s608 + $0xa8] sm:$0xf]
        %v727 = vld [vmem:[%s608 + $0xac] sm:$0xf]
        %v728 = vld [vmem:[%s608 + $0xb0] sm:$0xf]
        %v729 = vld [vmem:[%s608 + $0xb4] sm:$0xf]
        %v730 = vld [vmem:[%s608 + $0xb8] sm:$0xf]
        %v731 = vld [vmem:[%s608 + $0xbc] sm:$0xf]
        %v732 = vld [vmem:[%s612] sm:$0x1]
        %v733 = vld [vmem:[%s612 + $0x1] sm:$0x1]
        %v734 = vld [vmem:[%s612 + $0x2] sm:$0x1]
        %v735 = vld [vmem:[%s612 + $0x3] sm:$0x1]
        %v736 = vld [vmem:[%s612 + $0x4] sm:$0x1]
        %v737 = vld [vmem:[%s612 + $0x5] sm:$0x1]
        %v738 = vld [vmem:[%s612 + $0x6] sm:$0x1]
        %v739 = vld [vmem:[%s612 + $0x7] sm:$0x1]
        %v740 = vld [vmem:[%s612 + $0x8] sm:$0x1]
        %v741 = vld [vmem:[%s612 + $0x9] sm:$0x1]
        %v742 = vld [vmem:[%s612 + $0xa] sm:$0x1]
        %v743 = vld [vmem:[%s612 + $0xb] sm:$0x1]
        %v756 = vlaneseq
        %v757 = vshrl.u32 %v756, 7
        %v758 = vsub.s32 0, %v757
        %v759 = vrot.slane %v732, %v758
        %v760 = vlaneseq
        %v761 = vshrl.u32 %v760, 7
        %v762 = vsub.s32 0, %v761
        %v763 = vrot.slane %v733, %v762
        %v764 = vlaneseq
        %v765 = vshrl.u32 %v764, 7
        %v766 = vsub.s32 0, %v765
        %v767 = vrot.slane %v734, %v766
        %v768 = vlaneseq
        %v769 = vshrl.u32 %v768, 7
        %v770 = vsub.s32 0, %v769
        %v771 = vrot.slane %v735, %v770
        %v772 = vlaneseq
        %v773 = vshrl.u32 %v772, 7
        %v774 = vsub.s32 0, %v773
        %v775 = vrot.slane %v736, %v774
        %v776 = vlaneseq
        %v777 = vshrl.u32 %v776, 7
        %v778 = vsub.s32 0, %v777
        %v779 = vrot.slane %v737, %v778
        %v780 = vlaneseq
        %v781 = vshrl.u32 %v780, 7
        %v782 = vsub.s32 0, %v781
        %v783 = vrot.slane %v738, %v782
        %v784 = vlaneseq
        %v785 = vshrl.u32 %v784, 7
        %v786 = vsub.s32 0, %v785
        %v787 = vrot.slane %v739, %v786
        %v788 = vlaneseq
        %v789 = vshrl.u32 %v788, 7
        %v790 = vsub.s32 0, %v789
        %v791 = vrot.slane %v740, %v790
        %v792 = vlaneseq
        %v793 = vshrl.u32 %v792, 7
        %v794 = vsub.s32 0, %v793
        %v795 = vrot.slane %v741, %v794
        %v796 = vlaneseq
        %v797 = vshrl.u32 %v796, 7
        %v798 = vsub.s32 0, %v797
        %v799 = vrot.slane %v742, %v798
        %v800 = vlaneseq
        %v801 = vshrl.u32 %v800, 7
        %v802 = vsub.s32 0, %v801
        %v803 = vrot.slane %v743, %v802
        %v820 = vunpack.c.l.b16 %v684
        %v821 = vunpack.c.l.b16 %v685
        %v822 = vunpack.c.l.b16 %v686
        %v823 = vunpack.c.l.b16 %v687
        %v824 = vpack.c.b16 %v821, %v820
        %v825 = vpack.c.b16 %v823, %v822
        %v829 = vsel %vm654, %v683, 0
        %831 = vmatprep.subr.bf16.mxu0 0
        %832 = vmatpush1.bf16.msra.mxu0 %v824
        %833 = vmatprep.subr.bf16.mxu0 0
        %834 = vmatpush1.bf16.msra.mxu0 %v825
        %835 = vmatprep.subr.bf16.mxu0 0
        %836 = vmatpush1.bf16.msra.mxu0 0
        %837 = vmatprep.subr.bf16.mxu0 0
        %838 = vmatpush1.bf16.msra.mxu0 0
        %839 = vmatprep.subr.bf16.mxu0 0
        %840 = vmatpush1.bf16.msra.mxu0 0
        %841 = vmatprep.subr.bf16.mxu0 0
        %842 = vmatpush1.bf16.msra.mxu0 0
        %843 = vmatprep.subr.bf16.mxu0 0
        %844 = vmatpush1.bf16.msra.mxu0 0
        %845 = vmatprep.subr.bf16.mxu0 0
        %846 = vmatpush1.bf16.msra.mxu0 0
        %847 = vmatprep.subr.bf16.mxu0 0
        %848 = vmatpush1.bf16.msra.mxu0 0
        %849 = vmatprep.subr.bf16.mxu0 0
        %850 = vmatpush1.bf16.msra.mxu0 0
        %851 = vmatprep.subr.bf16.mxu0 0
        %852 = vmatpush1.bf16.msra.mxu0 0
        %853 = vmatprep.subr.bf16.mxu0 0
        %854 = vmatpush1.bf16.msra.mxu0 0
        %855 = vmatprep.subr.bf16.mxu0 0
        %856 = vmatpush1.bf16.msra.mxu0 0
        %857 = vmatprep.subr.bf16.mxu0 0
        %858 = vmatpush1.bf16.msra.mxu0 0
        %859 = vmatprep.subr.bf16.mxu0 0
        %860 = vmatpush1.bf16.msra.mxu0 0
        %861 = vmatprep.subr.bf16.mxu0 0
        %862 = vmatpush1.bf16.msra.mxu0 0
        %863 = vmatprep.mubr.bf16.mxu0 0
        %864 = vmatmul.mubr.bf16.gmra.mrb[0].mxu0 %v829
        %v865 = vpop.f32.mrb[0].mxu0
        %v866 = vadd.f32 %v759, %v865
        %v867 = vpop.f32.mrb[0].mxu0
        %v868 = vpop.f32.mrb[0].mxu0
        %v869 = vpop.f32.mrb[0].mxu0
        %870 = vdwg.mxu0
        %v875 = vunpack.c.l.b16 %v688
        %v876 = vunpack.c.l.b16 %v689
        %v877 = vunpack.c.l.b16 %v690
        %v878 = vunpack.c.l.b16 %v691
        %v879 = vpack.c.b16 %v876, %v875
        %v880 = vpack.c.b16 %v878, %v877
        %883 = vmatprep.subr.bf16.mxu0 0
        %884 = vmatpush1.bf16.msra.mxu0 %v879
        %885 = vmatprep.subr.bf16.mxu0 0
        %886 = vmatpush1.bf16.msra.mxu0 %v880
        %887 = vmatprep.subr.bf16.mxu0 0
        %888 = vmatpush1.bf16.msra.mxu0 0
        %889 = vmatprep.subr.bf16.mxu0 0
        %890 = vmatpush1.bf16.msra.mxu0 0
        %891 = vmatprep.subr.bf16.mxu0 0
        %892 = vmatpush1.bf16.msra.mxu0 0
        %893 = vmatprep.subr.bf16.mxu0 0
        %894 = vmatpush1.bf16.msra.mxu0 0
        %895 = vmatprep.subr.bf16.mxu0 0
        %896 = vmatpush1.bf16.msra.mxu0 0
        %897 = vmatprep.subr.bf16.mxu0 0
        %898 = vmatpush1.bf16.msra.mxu0 0
        %899 = vmatprep.subr.bf16.mxu0 0
        %900 = vmatpush1.bf16.msra.mxu0 0
        %901 = vmatprep.subr.bf16.mxu0 0
        %902 = vmatpush1.bf16.msra.mxu0 0
        %903 = vmatprep.subr.bf16.mxu0 0
        %904 = vmatpush1.bf16.msra.mxu0 0
        %905 = vmatprep.subr.bf16.mxu0 0
        %906 = vmatpush1.bf16.msra.mxu0 0
        %907 = vmatprep.subr.bf16.mxu0 0
        %908 = vmatpush1.bf16.msra.mxu0 0
        %909 = vmatprep.subr.bf16.mxu0 0
        %910 = vmatpush1.bf16.msra.mxu0 0
        %911 = vmatprep.subr.bf16.mxu0 0
        %912 = vmatpush1.bf16.msra.mxu0 0
        %913 = vmatprep.subr.bf16.mxu0 0
        %914 = vmatpush1.bf16.msra.mxu0 0
        %915 = vmatprep.mubr.bf16.mxu0 0
        %916 = vmatmul.mubr.bf16.gmra.mrb[0].mxu0 %v829
        %v917 = vpop.f32.mrb[0].mxu0
        %v918 = vadd.f32 %v763, %v917
        %v919 = vpop.f32.mrb[0].mxu0
        %v920 = vpop.f32.mrb[0].mxu0
        %v921 = vpop.f32.mrb[0].mxu0
        %922 = vdwg.mxu0
        %v927 = vunpack.c.l.b16 %v692
        %v928 = vunpack.c.l.b16 %v693
        %v929 = vunpack.c.l.b16 %v694
        %v930 = vunpack.c.l.b16 %v695
        %v931 = vpack.c.b16 %v928, %v927
        %v932 = vpack.c.b16 %v930, %v929
        %935 = vmatprep.subr.bf16.mxu0 0
        %936 = vmatpush1.bf16.msra.mxu0 %v931
        %937 = vmatprep.subr.bf16.mxu0 0
        %938 = vmatpush1.bf16.msra.mxu0 %v932
        %939 = vmatprep.subr.bf16.mxu0 0
        %940 = vmatpush1.bf16.msra.mxu0 0
        %941 = vmatprep.subr.bf16.mxu0 0
        %942 = vmatpush1.bf16.msra.mxu0 0
        %943 = vmatprep.subr.bf16.mxu0 0
        %944 = vmatpush1.bf16.msra.mxu0 0
        %945 = vmatprep.subr.bf16.mxu0 0
        %946 = vmatpush1.bf16.msra.mxu0 0
        %947 = vmatprep.subr.bf16.mxu0 0
        %948 = vmatpush1.bf16.msra.mxu0 0
        %949 = vmatprep.subr.bf16.mxu0 0
        %950 = vmatpush1.bf16.msra.mxu0 0
        %951 = vmatprep.subr.bf16.mxu0 0
        %952 = vmatpush1.bf16.msra.mxu0 0
        %953 = vmatprep.subr.bf16.mxu0 0
        %954 = vmatpush1.bf16.msra.mxu0 0
        %955 = vmatprep.subr.bf16.mxu0 0
        %956 = vmatpush1.bf16.msra.mxu0 0
        %957 = vmatprep.subr.bf16.mxu0 0
        %958 = vmatpush1.bf16.msra.mxu0 0
        %959 = vmatprep.subr.bf16.mxu0 0
        %960 = vmatpush1.bf16.msra.mxu0 0
        %961 = vmatprep.subr.bf16.mxu0 0
        %962 = vmatpush1.bf16.msra.mxu0 0
        %963 = vmatprep.subr.bf16.mxu0 0
        %964 = vmatpush1.bf16.msra.mxu0 0
        %965 = vmatprep.subr.bf16.mxu0 0
        %966 = vmatpush1.bf16.msra.mxu0 0
        %967 = vmatprep.mubr.bf16.mxu0 0
        %968 = vmatmul.mubr.bf16.gmra.mrb[0].mxu0 %v829
        %v969 = vpop.f32.mrb[0].mxu0
        %v970 = vadd.f32 %v767, %v969
        %v971 = vpop.f32.mrb[0].mxu0
        %v972 = vpop.f32.mrb[0].mxu0
        %v973 = vpop.f32.mrb[0].mxu0
        %974 = vdwg.mxu0
        %v979 = vunpack.c.l.b16 %v696
        %v980 = vunpack.c.l.b16 %v697
        %v981 = vunpack.c.l.b16 %v698
        %v982 = vunpack.c.l.b16 %v699
        %v983 = vpack.c.b16 %v980, %v979
        %v984 = vpack.c.b16 %v982, %v981
        %987 = vmatprep.subr.bf16.mxu0 0
        %988 = vmatpush1.bf16.msra.mxu0 %v983
        %989 = vmatprep.subr.bf16.mxu0 0
        %990 = vmatpush1.bf16.msra.mxu0 %v984
        %991 = vmatprep.subr.bf16.mxu0 0
        %992 = vmatpush1.bf16.msra.mxu0 0
        %993 = vmatprep.subr.bf16.mxu0 0
        %994 = vmatpush1.bf16.msra.mxu0 0
        %995 = vmatprep.subr.bf16.mxu0 0
        %996 = vmatpush1.bf16.msra.mxu0 0
        %997 = vmatprep.subr.bf16.mxu0 0
        %998 = vmatpush1.bf16.msra.mxu0 0
        %999 = vmatprep.subr.bf16.mxu0 0
        %1000 = vmatpush1.bf16.msra.mxu0 0
        %1001 = vmatprep.subr.bf16.mxu0 0
        %1002 = vmatpush1.bf16.msra.mxu0 0
        %1003 = vmatprep.subr.bf16.mxu0 0
        %1004 = vmatpush1.bf16.msra.mxu0 0
        %1005 = vmatprep.subr.bf16.mxu0 0
        %1006 = vmatpush1.bf16.msra.mxu0 0
        %1007 = vmatprep.subr.bf16.mxu0 0
        %1008 = vmatpush1.bf16.msra.mxu0 0
        %1009 = vmatprep.subr.bf16.mxu0 0
        %1010 = vmatpush1.bf16.msra.mxu0 0
        %1011 = vmatprep.subr.bf16.mxu0 0
        %1012 = vmatpush1.bf16.msra.mxu0 0
        %1013 = vmatprep.subr.bf16.mxu0 0
        %1014 = vmatpush1.bf16.msra.mxu0 0
        %1015 = vmatprep.subr.bf16.mxu0 0
        %1016 = vmatpush1.bf16.msra.mxu0 0
        %1017 = vmatprep.subr.bf16.mxu0 0
        %1018 = vmatpush1.bf16.msra.mxu0 0
        %1019 = vmatprep.mubr.bf16.mxu0 0
        %1020 = vmatmul.mubr.bf16.gmra.mrb[0].mxu0 %v829
        %v1021 = vpop.f32.mrb[0].mxu0
        %v1022 = vadd.f32 %v771, %v1021
        %v1023 = vpop.f32.mrb[0].mxu0
        %v1024 = vpop.f32.mrb[0].mxu0
        %v1025 = vpop.f32.mrb[0].mxu0
        %1026 = vdwg.mxu0
        %v1031 = vunpack.c.l.b16 %v700
        %v1032 = vunpack.c.l.b16 %v701
        %v1033 = vunpack.c.l.b16 %v702
        %v1034 = vunpack.c.l.b16 %v703
        %v1035 = vpack.c.b16 %v1032, %v1031
        %v1036 = vpack.c.b16 %v1034, %v1033
        %1039 = vmatprep.subr.bf16.mxu0 0
        %1040 = vmatpush1.bf16.msra.mxu0 %v1035
        %1041 = vmatprep.subr.bf16.mxu0 0
        %1042 = vmatpush1.bf16.msra.mxu0 %v1036
        %1043 = vmatprep.subr.bf16.mxu0 0
        %1044 = vmatpush1.bf16.msra.mxu0 0
        %1045 = vmatprep.subr.bf16.mxu0 0
        %1046 = vmatpush1.bf16.msra.mxu0 0
        %1047 = vmatprep.subr.bf16.mxu0 0
        %1048 = vmatpush1.bf16.msra.mxu0 0
        %1049 = vmatprep.subr.bf16.mxu0 0
        %1050 = vmatpush1.bf16.msra.mxu0 0
        %1051 = vmatprep.subr.bf16.mxu0 0
        %1052 = vmatpush1.bf16.msra.mxu0 0
        %1053 = vmatprep.subr.bf16.mxu0 0
        %1054 = vmatpush1.bf16.msra.mxu0 0
        %1055 = vmatprep.subr.bf16.mxu0 0
        %1056 = vmatpush1.bf16.msra.mxu0 0
        %1057 = vmatprep.subr.bf16.mxu0 0
        %1058 = vmatpush1.bf16.msra.mxu0 0
        %1059 = vmatprep.subr.bf16.mxu0 0
        %1060 = vmatpush1.bf16.msra.mxu0 0
        %1061 = vmatprep.subr.bf16.mxu0 0
        %1062 = vmatpush1.bf16.msra.mxu0 0
        %1063 = vmatprep.subr.bf16.mxu0 0
        %1064 = vmatpush1.bf16.msra.mxu0 0
        %1065 = vmatprep.subr.bf16.mxu0 0
        %1066 = vmatpush1.bf16.msra.mxu0 0
        %1067 = vmatprep.subr.bf16.mxu0 0
        %1068 = vmatpush1.bf16.msra.mxu0 0
        %1069 = vmatprep.subr.bf16.mxu0 0
        %1070 = vmatpush1.bf16.msra.mxu0 0
        %1071 = vmatprep.mubr.bf16.mxu0 0
        %1072 = vmatmul.mubr.bf16.gmra.mrb[0].mxu0 %v829
        %v1073 = vpop.f32.mrb[0].mxu0
        %v1074 = vadd.f32 %v775, %v1073
        %v1075 = vpop.f32.mrb[0].mxu0
        %v1076 = vpop.f32.mrb[0].mxu0
        %v1077 = vpop.f32.mrb[0].mxu0
        %1078 = vdwg.mxu0
        %v1083 = vunpack.c.l.b16 %v704
        %v1084 = vunpack.c.l.b16 %v705
        %v1085 = vunpack.c.l.b16 %v706
        %v1086 = vunpack.c.l.b16 %v707
        %v1087 = vpack.c.b16 %v1084, %v1083
        %v1088 = vpack.c.b16 %v1086, %v1085
        %1091 = vmatprep.subr.bf16.mxu0 0
        %1092 = vmatpush1.bf16.msra.mxu0 %v1087
        %1093 = vmatprep.subr.bf16.mxu0 0
        %1094 = vmatpush1.bf16.msra.mxu0 %v1088
        %1095 = vmatprep.subr.bf16.mxu0 0
        %1096 = vmatpush1.bf16.msra.mxu0 0
        %1097 = vmatprep.subr.bf16.mxu0 0
        %1098 = vmatpush1.bf16.msra.mxu0 0
        %1099 = vmatprep.subr.bf16.mxu0 0
        %1100 = vmatpush1.bf16.msra.mxu0 0
        %1101 = vmatprep.subr.bf16.mxu0 0
        %1102 = vmatpush1.bf16.msra.mxu0 0
        %1103 = vmatprep.subr.bf16.mxu0 0
        %1104 = vmatpush1.bf16.msra.mxu0 0
        %1105 = vmatprep.subr.bf16.mxu0 0
        %1106 = vmatpush1.bf16.msra.mxu0 0
        %1107 = vmatprep.subr.bf16.mxu0 0
        %1108 = vmatpush1.bf16.msra.mxu0 0
        %1109 = vmatprep.subr.bf16.mxu0 0
        %1110 = vmatpush1.bf16.msra.mxu0 0
        %1111 = vmatprep.subr.bf16.mxu0 0
        %1112 = vmatpush1.bf16.msra.mxu0 0
        %1113 = vmatprep.subr.bf16.mxu0 0
        %1114 = vmatpush1.bf16.msra.mxu0 0
        %1115 = vmatprep.subr.bf16.mxu0 0
        %1116 = vmatpush1.bf16.msra.mxu0 0
        %1117 = vmatprep.subr.bf16.mxu0 0
        %1118 = vmatpush1.bf16.msra.mxu0 0
        %1119 = vmatprep.subr.bf16.mxu0 0
        %1120 = vmatpush1.bf16.msra.mxu0 0
        %1121 = vmatprep.subr.bf16.mxu0 0
        %1122 = vmatpush1.bf16.msra.mxu0 0
        %1123 = vmatprep.mubr.bf16.mxu0 0
        %1124 = vmatmul.mubr.bf16.gmra.mrb[0].mxu0 %v829
        %v1125 = vpop.f32.mrb[0].mxu0
        %v1126 = vadd.f32 %v779, %v1125
        %v1127 = vpop.f32.mrb[0].mxu0
        %v1128 = vpop.f32.mrb[0].mxu0
        %v1129 = vpop.f32.mrb[0].mxu0
        %1130 = vdwg.mxu0
        %v1135 = vunpack.c.l.b16 %v708
        %v1136 = vunpack.c.l.b16 %v709
        %v1137 = vunpack.c.l.b16 %v710
        %v1138 = vunpack.c.l.b16 %v711
        %v1139 = vpack.c.b16 %v1136, %v1135
        %v1140 = vpack.c.b16 %v1138, %v1137
        %1143 = vmatprep.subr.bf16.mxu0 0
        %1144 = vmatpush1.bf16.msra.mxu0 %v1139
        %1145 = vmatprep.subr.bf16.mxu0 0
        %1146 = vmatpush1.bf16.msra.mxu0 %v1140
        %1147 = vmatprep.subr.bf16.mxu0 0
        %1148 = vmatpush1.bf16.msra.mxu0 0
        %1149 = vmatprep.subr.bf16.mxu0 0
        %1150 = vmatpush1.bf16.msra.mxu0 0
        %1151 = vmatprep.subr.bf16.mxu0 0
        %1152 = vmatpush1.bf16.msra.mxu0 0
        %1153 = vmatprep.subr.bf16.mxu0 0
        %1154 = vmatpush1.bf16.msra.mxu0 0
        %1155 = vmatprep.subr.bf16.mxu0 0
        %1156 = vmatpush1.bf16.msra.mxu0 0
        %1157 = vmatprep.subr.bf16.mxu0 0
        %1158 = vmatpush1.bf16.msra.mxu0 0
        %1159 = vmatprep.subr.bf16.mxu0 0
        %1160 = vmatpush1.bf16.msra.mxu0 0
        %1161 = vmatprep.subr.bf16.mxu0 0
        %1162 = vmatpush1.bf16.msra.mxu0 0
        %1163 = vmatprep.subr.bf16.mxu0 0
        %1164 = vmatpush1.bf16.msra.mxu0 0
        %1165 = vmatprep.subr.bf16.mxu0 0
        %1166 = vmatpush1.bf16.msra.mxu0 0
        %1167 = vmatprep.subr.bf16.mxu0 0
        %1168 = vmatpush1.bf16.msra.mxu0 0
        %1169 = vmatprep.subr.bf16.mxu0 0
        %1170 = vmatpush1.bf16.msra.mxu0 0
        %1171 = vmatprep.subr.bf16.mxu0 0
        %1172 = vmatpush1.bf16.msra.mxu0 0
        %1173 = vmatprep.subr.bf16.mxu0 0
        %1174 = vmatpush1.bf16.msra.mxu0 0
        %1175 = vmatprep.mubr.bf16.mxu0 0
        %1176 = vmatmul.mubr.bf16.gmra.mrb[0].mxu0 %v829
        %v1177 = vpop.f32.mrb[0].mxu0
        %v1178 = vadd.f32 %v783, %v1177
        %v1179 = vpop.f32.mrb[0].mxu0
        %v1180 = vpop.f32.mrb[0].mxu0
        %v1181 = vpop.f32.mrb[0].mxu0
        %1182 = vdwg.mxu0
        %v1187 = vunpack.c.l.b16 %v712
        %v1188 = vunpack.c.l.b16 %v713
        %v1189 = vunpack.c.l.b16 %v714
        %v1190 = vunpack.c.l.b16 %v715
        %v1191 = vpack.c.b16 %v1188, %v1187
        %v1192 = vpack.c.b16 %v1190, %v1189
        %1195 = vmatprep.subr.bf16.mxu0 0
        %1196 = vmatpush1.bf16.msra.mxu0 %v1191
        %1197 = vmatprep.subr.bf16.mxu0 0
        %1198 = vmatpush1.bf16.msra.mxu0 %v1192
        %1199 = vmatprep.subr.bf16.mxu0 0
        %1200 = vmatpush1.bf16.msra.mxu0 0
        %1201 = vmatprep.subr.bf16.mxu0 0
        %1202 = vmatpush1.bf16.msra.mxu0 0
        %1203 = vmatprep.subr.bf16.mxu0 0
        %1204 = vmatpush1.bf16.msra.mxu0 0
        %1205 = vmatprep.subr.bf16.mxu0 0
        %1206 = vmatpush1.bf16.msra.mxu0 0
        %1207 = vmatprep.subr.bf16.mxu0 0
        %1208 = vmatpush1.bf16.msra.mxu0 0
        %1209 = vmatprep.subr.bf16.mxu0 0
        %1210 = vmatpush1.bf16.msra.mxu0 0
        %1211 = vmatprep.subr.bf16.mxu0 0
        %1212 = vmatpush1.bf16.msra.mxu0 0
        %1213 = vmatprep.subr.bf16.mxu0 0
        %1214 = vmatpush1.bf16.msra.mxu0 0
        %1215 = vmatprep.subr.bf16.mxu0 0
        %1216 = vmatpush1.bf16.msra.mxu0 0
        %1217 = vmatprep.subr.bf16.mxu0 0
        %1218 = vmatpush1.bf16.msra.mxu0 0
        %1219 = vmatprep.subr.bf16.mxu0 0
        %1220 = vmatpush1.bf16.msra.mxu0 0
        %1221 = vmatprep.subr.bf16.mxu0 0
        %1222 = vmatpush1.bf16.msra.mxu0 0
        %1223 = vmatprep.subr.bf16.mxu0 0
        %1224 = vmatpush1.bf16.msra.mxu0 0
        %1225 = vmatprep.subr.bf16.mxu0 0
        %1226 = vmatpush1.bf16.msra.mxu0 0
        %1227 = vmatprep.mubr.bf16.mxu0 0
        %1228 = vmatmul.mubr.bf16.gmra.mrb[0].mxu0 %v829
        %v1229 = vpop.f32.mrb[0].mxu0
        %v1230 = vadd.f32 %v787, %v1229
        %v1231 = vpop.f32.mrb[0].mxu0
        %v1232 = vpop.f32.mrb[0].mxu0
        %v1233 = vpop.f32.mrb[0].mxu0
        %1234 = vdwg.mxu0
        %v1239 = vunpack.c.l.b16 %v716
        %v1240 = vunpack.c.l.b16 %v717
        %v1241 = vunpack.c.l.b16 %v718
        %v1242 = vunpack.c.l.b16 %v719
        %v1243 = vpack.c.b16 %v1240, %v1239
        %v1244 = vpack.c.b16 %v1242, %v1241
        %1247 = vmatprep.subr.bf16.mxu0 0
        %1248 = vmatpush1.bf16.msra.mxu0 %v1243
        %1249 = vmatprep.subr.bf16.mxu0 0
        %1250 = vmatpush1.bf16.msra.mxu0 %v1244
        %1251 = vmatprep.subr.bf16.mxu0 0
        %1252 = vmatpush1.bf16.msra.mxu0 0
        %1253 = vmatprep.subr.bf16.mxu0 0
        %1254 = vmatpush1.bf16.msra.mxu0 0
        %1255 = vmatprep.subr.bf16.mxu0 0
        %1256 = vmatpush1.bf16.msra.mxu0 0
        %1257 = vmatprep.subr.bf16.mxu0 0
        %1258 = vmatpush1.bf16.msra.mxu0 0
        %1259 = vmatprep.subr.bf16.mxu0 0
        %1260 = vmatpush1.bf16.msra.mxu0 0
        %1261 = vmatprep.subr.bf16.mxu0 0
        %1262 = vmatpush1.bf16.msra.mxu0 0
        %1263 = vmatprep.subr.bf16.mxu0 0
        %1264 = vmatpush1.bf16.msra.mxu0 0
        %1265 = vmatprep.subr.bf16.mxu0 0
        %1266 = vmatpush1.bf16.msra.mxu0 0
        %1267 = vmatprep.subr.bf16.mxu0 0
        %1268 = vmatpush1.bf16.msra.mxu0 0
        %1269 = vmatprep.subr.bf16.mxu0 0
        %1270 = vmatpush1.bf16.msra.mxu0 0
        %1271 = vmatprep.subr.bf16.mxu0 0
        %1272 = vmatpush1.bf16.msra.mxu0 0
        %1273 = vmatprep.subr.bf16.mxu0 0
        %1274 = vmatpush1.bf16.msra.mxu0 0
        %1275 = vmatprep.subr.bf16.mxu0 0
        %1276 = vmatpush1.bf16.msra.mxu0 0
        %1277 = vmatprep.subr.bf16.mxu0 0
        %1278 = vmatpush1.bf16.msra.mxu0 0
        %1279 = vmatprep.mubr.bf16.mxu0 0
        %1280 = vmatmul.mubr.bf16.gmra.mrb[0].mxu0 %v829
        %v1281 = vpop.f32.mrb[0].mxu0
        %v1282 = vadd.f32 %v791, %v1281
        %v1283 = vpop.f32.mrb[0].mxu0
        %v1284 = vpop.f32.mrb[0].mxu0
        %v1285 = vpop.f32.mrb[0].mxu0
        %1286 = vdwg.mxu0
        %v1291 = vunpack.c.l.b16 %v720
        %v1292 = vunpack.c.l.b16 %v721
        %v1293 = vunpack.c.l.b16 %v722
        %v1294 = vunpack.c.l.b16 %v723
        %v1295 = vpack.c.b16 %v1292, %v1291
        %v1296 = vpack.c.b16 %v1294, %v1293
        %1299 = vmatprep.subr.bf16.mxu0 0
        %1300 = vmatpush1.bf16.msra.mxu0 %v1295
        %1301 = vmatprep.subr.bf16.mxu0 0
        %1302 = vmatpush1.bf16.msra.mxu0 %v1296
        %1303 = vmatprep.subr.bf16.mxu0 0
        %1304 = vmatpush1.bf16.msra.mxu0 0
        %1305 = vmatprep.subr.bf16.mxu0 0
        %1306 = vmatpush1.bf16.msra.mxu0 0
        %1307 = vmatprep.subr.bf16.mxu0 0
        %1308 = vmatpush1.bf16.msra.mxu0 0
        %1309 = vmatprep.subr.bf16.mxu0 0
        %1310 = vmatpush1.bf16.msra.mxu0 0
        %1311 = vmatprep.subr.bf16.mxu0 0
        %1312 = vmatpush1.bf16.msra.mxu0 0
        %1313 = vmatprep.subr.bf16.mxu0 0
        %1314 = vmatpush1.bf16.msra.mxu0 0
        %1315 = vmatprep.subr.bf16.mxu0 0
        %1316 = vmatpush1.bf16.msra.mxu0 0
        %1317 = vmatprep.subr.bf16.mxu0 0
        %1318 = vmatpush1.bf16.msra.mxu0 0
        %1319 = vmatprep.subr.bf16.mxu0 0
        %1320 = vmatpush1.bf16.msra.mxu0 0
        %1321 = vmatprep.subr.bf16.mxu0 0
        %1322 = vmatpush1.bf16.msra.mxu0 0
        %1323 = vmatprep.subr.bf16.mxu0 0
        %1324 = vmatpush1.bf16.msra.mxu0 0
        %1325 = vmatprep.subr.bf16.mxu0 0
        %1326 = vmatpush1.bf16.msra.mxu0 0
        %1327 = vmatprep.subr.bf16.mxu0 0
        %1328 = vmatpush1.bf16.msra.mxu0 0
        %1329 = vmatprep.subr.bf16.mxu0 0
        %1330 = vmatpush1.bf16.msra.mxu0 0
        %1331 = vmatprep.mubr.bf16.mxu0 0
        %1332 = vmatmul.mubr.bf16.gmra.mrb[0].mxu0 %v829
        %v1333 = vpop.f32.mrb[0].mxu0
        %v1334 = vadd.f32 %v795, %v1333
        %v1335 = vpop.f32.mrb[0].mxu0
        %v1336 = vpop.f32.mrb[0].mxu0
        %v1337 = vpop.f32.mrb[0].mxu0
        %1338 = vdwg.mxu0
        %v1343 = vunpack.c.l.b16 %v724
        %v1344 = vunpack.c.l.b16 %v725
        %v1345 = vunpack.c.l.b16 %v726
        %v1346 = vunpack.c.l.b16 %v727
        %v1347 = vpack.c.b16 %v1344, %v1343
        %v1348 = vpack.c.b16 %v1346, %v1345
        %1351 = vmatprep.subr.bf16.mxu0 0
        %1352 = vmatpush1.bf16.msra.mxu0 %v1347
        %1353 = vmatprep.subr.bf16.mxu0 0
        %1354 = vmatpush1.bf16.msra.mxu0 %v1348
        %1355 = vmatprep.subr.bf16.mxu0 0
        %1356 = vmatpush1.bf16.msra.mxu0 0
        %1357 = vmatprep.subr.bf16.mxu0 0
        %1358 = vmatpush1.bf16.msra.mxu0 0
        %1359 = vmatprep.subr.bf16.mxu0 0
        %1360 = vmatpush1.bf16.msra.mxu0 0
        %1361 = vmatprep.subr.bf16.mxu0 0
        %1362 = vmatpush1.bf16.msra.mxu0 0
        %1363 = vmatprep.subr.bf16.mxu0 0
        %1364 = vmatpush1.bf16.msra.mxu0 0
        %1365 = vmatprep.subr.bf16.mxu0 0
        %1366 = vmatpush1.bf16.msra.mxu0 0
        %1367 = vmatprep.subr.bf16.mxu0 0
        %1368 = vmatpush1.bf16.msra.mxu0 0
        %1369 = vmatprep.subr.bf16.mxu0 0
        %1370 = vmatpush1.bf16.msra.mxu0 0
        %1371 = vmatprep.subr.bf16.mxu0 0
        %1372 = vmatpush1.bf16.msra.mxu0 0
        %1373 = vmatprep.subr.bf16.mxu0 0
        %1374 = vmatpush1.bf16.msra.mxu0 0
        %1375 = vmatprep.subr.bf16.mxu0 0
        %1376 = vmatpush1.bf16.msra.mxu0 0
        %1377 = vmatprep.subr.bf16.mxu0 0
        %1378 = vmatpush1.bf16.msra.mxu0 0
        %1379 = vmatprep.subr.bf16.mxu0 0
        %1380 = vmatpush1.bf16.msra.mxu0 0
        %1381 = vmatprep.subr.bf16.mxu0 0
        %1382 = vmatpush1.bf16.msra.mxu0 0
        %1383 = vmatprep.mubr.bf16.mxu0 0
        %1384 = vmatmul.mubr.bf16.gmra.mrb[0].mxu0 %v829
        %v1385 = vpop.f32.mrb[0].mxu0
        %v1386 = vadd.f32 %v799, %v1385
        %v1387 = vpop.f32.mrb[0].mxu0
        %v1388 = vpop.f32.mrb[0].mxu0
        %v1389 = vpop.f32.mrb[0].mxu0
        %1390 = vdwg.mxu0
        %v1395 = vunpack.c.l.b16 %v728
        %v1396 = vunpack.c.l.b16 %v729
        %v1397 = vunpack.c.l.b16 %v730
        %v1398 = vunpack.c.l.b16 %v731
        %v1399 = vpack.c.b16 %v1396, %v1395
        %v1400 = vpack.c.b16 %v1398, %v1397
        %1403 = vmatprep.subr.bf16.mxu0 0
        %1404 = vmatpush1.bf16.msra.mxu0 %v1399
        %1405 = vmatprep.subr.bf16.mxu0 0
        %1406 = vmatpush1.bf16.msra.mxu0 %v1400
        %1407 = vmatprep.subr.bf16.mxu0 0
        %1408 = vmatpush1.bf16.msra.mxu0 0
        %1409 = vmatprep.subr.bf16.mxu0 0
        %1410 = vmatpush1.bf16.msra.mxu0 0
        %1411 = vmatprep.subr.bf16.mxu0 0
        %1412 = vmatpush1.bf16.msra.mxu0 0
        %1413 = vmatprep.subr.bf16.mxu0 0
        %1414 = vmatpush1.bf16.msra.mxu0 0
        %1415 = vmatprep.subr.bf16.mxu0 0
        %1416 = vmatpush1.bf16.msra.mxu0 0
        %1417 = vmatprep.subr.bf16.mxu0 0
        %1418 = vmatpush1.bf16.msra.mxu0 0
        %1419 = vmatprep.subr.bf16.mxu0 0
        %1420 = vmatpush1.bf16.msra.mxu0 0
        %1421 = vmatprep.subr.bf16.mxu0 0
        %1422 = vmatpush1.bf16.msra.mxu0 0
        %1423 = vmatprep.subr.bf16.mxu0 0
        %1424 = vmatpush1.bf16.msra.mxu0 0
        %1425 = vmatprep.subr.bf16.mxu0 0
        %1426 = vmatpush1.bf16.msra.mxu0 0
        %1427 = vmatprep.subr.bf16.mxu0 0
        %1428 = vmatpush1.bf16.msra.mxu0 0
        %1429 = vmatprep.subr.bf16.mxu0 0
        %1430 = vmatpush1.bf16.msra.mxu0 0
        %1431 = vmatprep.subr.bf16.mxu0 0
        %1432 = vmatpush1.bf16.msra.mxu0 0
        %1433 = vmatprep.subr.bf16.mxu0 0
        %1434 = vmatpush1.bf16.msra.mxu0 0
        %1435 = vmatprep.mubr.bf16.mxu0 0
        %1436 = vmatmul.mubr.bf16.gmra.mrb[0].mxu0 %v829
        %v1437 = vpop.f32.mrb[0].mxu0
        %v1438 = vadd.f32 %v803, %v1437
        %v1439 = vpop.f32.mrb[0].mxu0
        %v1440 = vpop.f32.mrb[0].mxu0
        %v1441 = vpop.f32.mrb[0].mxu0
        %1442 = vdwg.mxu0
        %v1443 = vpack.c.bf16 %v866, %v866
        %v1444 = vpack.c.bf16 %v918, %v918
        %v1445 = vpack.c.bf16 %v970, %v970
        %v1446 = vpack.c.bf16 %v1022, %v1022
        %v1447 = vpack.c.bf16 %v1074, %v1074
        %v1448 = vpack.c.bf16 %v1126, %v1126
        %v1449 = vpack.c.bf16 %v1178, %v1178
        %v1450 = vpack.c.bf16 %v1230, %v1230
        %vm1451 = vcmask 64512
        %v1453 = vsel %vm1451, %v1443, 0
        %v1456 = vsel %vm1451, %v1447, 0
        %1458 = vmatprep.subr.bf16.mxu0 0
        %1459 = vmatpush1.bf16.xpose.msra.mxu0 %v1456
        %1460 = vmatprep.subr.bf16.mxu0 0
        %1461 = vmatpush1.bf16.xpose.msra.mxu0 0
        %1462 = vmatprep.subr.bf16.mxu0 0
        %1463 = vmatpush1.bf16.xpose.msra.mxu0 0
        %1464 = vmatprep.subr.bf16.mxu0 0
        %1465 = vmatpush1.bf16.xpose.msra.mxu0 0
        %1466 = vmatprep.subr.bf16.mxu0 0
        %1467 = vmatpush1.bf16.xpose.msra.mxu0 0
        %1468 = vmatprep.subr.bf16.mxu0 0
        %1469 = vmatpush1.bf16.xpose.msra.mxu0 0
        %1470 = vmatprep.subr.bf16.mxu0 0
        %1471 = vmatpush1.bf16.xpose.msra.mxu0 0
        %1472 = vmatprep.subr.bf16.mxu0 0
        %1473 = vmatpush1.bf16.xpose.msra.mxu0 0
        %1474 = vmatprep.subr.bf16.mxu0 0
        %1475 = vmatpush1.bf16.xpose.msra.mxu0 0
        %1476 = vmatprep.subr.bf16.mxu0 0
        %1477 = vmatpush1.bf16.xpose.msra.mxu0 0
        %1478 = vmatprep.subr.bf16.mxu0 0
        %1479 = vmatpush1.bf16.xpose.msra.mxu0 0
        %1480 = vmatprep.subr.bf16.mxu0 0
        %1481 = vmatpush1.bf16.xpose.msra.mxu0 0
        %1482 = vmatprep.subr.bf16.mxu0 0
        %1483 = vmatpush1.bf16.xpose.msra.mxu0 0
        %1484 = vmatprep.subr.bf16.mxu0 0
        %1485 = vmatpush1.bf16.xpose.msra.mxu0 0
        %1486 = vmatprep.subr.bf16.mxu0 0
        %1487 = vmatpush1.bf16.xpose.msra.mxu0 0
        %1488 = vmatprep.subr.bf16.mxu0 0
        %1489 = vmatpush1.bf16.xpose.msra.mxu0 0
        %1490 = vmatprep.mubr.bf16.mxu0 0
        %1491 = vmatmul.mubr.bf16.gmra.mrb[0].mxu0 %v1453
        %v1492 = vpop.f32.mrb[0].mxu0
        %v1493 = vadd.f32 0.0, %v1492
        %v1494 = vpop.f32.mrb[0].mxu0
        %v1495 = vpop.f32.mrb[0].mxu0
        %v1496 = vpop.f32.mrb[0].mxu0
        %1497 = vdwg.mxu0
        %v1499 = vsel %vm1451, %v1444, 0
        %v1502 = vsel %vm1451, %v1448, 0
        %1504 = vmatprep.subr.bf16.mxu0 0
        %1505 = vmatpush1.bf16.xpose.msra.mxu0 %v1502
        %1506 = vmatprep.subr.bf16.mxu0 0
        %1507 = vmatpush1.bf16.xpose.msra.mxu0 0
        %1508 = vmatprep.subr.bf16.mxu0 0
        %1509 = vmatpush1.bf16.xpose.msra.mxu0 0
        %1510 = vmatprep.subr.bf16.mxu0 0
        %1511 = vmatpush1.bf16.xpose.msra.mxu0 0
        %1512 = vmatprep.subr.bf16.mxu0 0
        %1513 = vmatpush1.bf16.xpose.msra.mxu0 0
        %1514 = vmatprep.subr.bf16.mxu0 0
        %1515 = vmatpush1.bf16.xpose.msra.mxu0 0
        %1516 = vmatprep.subr.bf16.mxu0 0
        %1517 = vmatpush1.bf16.xpose.msra.mxu0 0
        %1518 = vmatprep.subr.bf16.mxu0 0
        %1519 = vmatpush1.bf16.xpose.msra.mxu0 0
        %1520 = vmatprep.subr.bf16.mxu0 0
        %1521 = vmatpush1.bf16.xpose.msra.mxu0 0
        %1522 = vmatprep.subr.bf16.mxu0 0
        %1523 = vmatpush1.bf16.xpose.msra.mxu0 0
        %1524 = vmatprep.subr.bf16.mxu0 0
        %1525 = vmatpush1.bf16.xpose.msra.mxu0 0
        %1526 = vmatprep.subr.bf16.mxu0 0
        %1527 = vmatpush1.bf16.xpose.msra.mxu0 0
        %1528 = vmatprep.subr.bf16.mxu0 0
        %1529 = vmatpush1.bf16.xpose.msra.mxu0 0
        %1530 = vmatprep.subr.bf16.mxu0 0
        %1531 = vmatpush1.bf16.xpose.msra.mxu0 0
        %1532 = vmatprep.subr.bf16.mxu0 0
        %1533 = vmatpush1.bf16.xpose.msra.mxu0 0
        %1534 = vmatprep.subr.bf16.mxu0 0
        %1535 = vmatpush1.bf16.xpose.msra.mxu0 0
        %1536 = vmatprep.mubr.bf16.mxu0 0
        %1537 = vmatmul.mubr.bf16.gmra.mrb[0].mxu0 %v1499
        %v1538 = vpop.f32.mrb[0].mxu0
        %v1539 = vadd.f32 0.0, %v1538
        %v1540 = vpop.f32.mrb[0].mxu0
        %v1541 = vpop.f32.mrb[0].mxu0
        %v1542 = vpop.f32.mrb[0].mxu0
        %1543 = vdwg.mxu0
        %v1545 = vsel %vm1451, %v1445, 0
        %v1548 = vsel %vm1451, %v1449, 0
        %1550 = vmatprep.subr.bf16.mxu0 0
        %1551 = vmatpush1.bf16.xpose.msra.mxu0 %v1548
        %1552 = vmatprep.subr.bf16.mxu0 0
        %1553 = vmatpush1.bf16.xpose.msra.mxu0 0
        %1554 = vmatprep.subr.bf16.mxu0 0
        %1555 = vmatpush1.bf16.xpose.msra.mxu0 0
        %1556 = vmatprep.subr.bf16.mxu0 0
        %1557 = vmatpush1.bf16.xpose.msra.mxu0 0
        %1558 = vmatprep.subr.bf16.mxu0 0
        %1559 = vmatpush1.bf16.xpose.msra.mxu0 0
        %1560 = vmatprep.subr.bf16.mxu0 0
        %1561 = vmatpush1.bf16.xpose.msra.mxu0 0
        %1562 = vmatprep.subr.bf16.mxu0 0
        %1563 = vmatpush1.bf16.xpose.msra.mxu0 0
        %1564 = vmatprep.subr.bf16.mxu0 0
        %1565 = vmatpush1.bf16.xpose.msra.mxu0 0
        %1566 = vmatprep.subr.bf16.mxu0 0
        %1567 = vmatpush1.bf16.xpose.msra.mxu0 0
        %1568 = vmatprep.subr.bf16.mxu0 0
        %1569 = vmatpush1.bf16.xpose.msra.mxu0 0
        %1570 = vmatprep.subr.bf16.mxu0 0
        %1571 = vmatpush1.bf16.xpose.msra.mxu0 0
        %1572 = vmatprep.subr.bf16.mxu0 0
        %1573 = vmatpush1.bf16.xpose.msra.mxu0 0
        %1574 = vmatprep.subr.bf16.mxu0 0
        %1575 = vmatpush1.bf16.xpose.msra.mxu0 0
        %1576 = vmatprep.subr.bf16.mxu0 0
        %1577 = vmatpush1.bf16.xpose.msra.mxu0 0
        %1578 = vmatprep.subr.bf16.mxu0 0
        %1579 = vmatpush1.bf16.xpose.msra.mxu0 0
        %1580 = vmatprep.subr.bf16.mxu0 0
        %1581 = vmatpush1.bf16.xpose.msra.mxu0 0
        %1582 = vmatprep.mubr.bf16.mxu0 0
        %1583 = vmatmul.mubr.bf16.gmra.mrb[0].mxu0 %v1545
        %v1584 = vpop.f32.mrb[0].mxu0
        %v1585 = vadd.f32 0.0, %v1584
        %v1586 = vpop.f32.mrb[0].mxu0
        %v1587 = vpop.f32.mrb[0].mxu0
        %v1588 = vpop.f32.mrb[0].mxu0
        %1589 = vdwg.mxu0
        %v1591 = vsel %vm1451, %v1446, 0
        %v1594 = vsel %vm1451, %v1450, 0
        %1596 = vmatprep.subr.bf16.mxu0 0
        %1597 = vmatpush1.bf16.xpose.msra.mxu0 %v1594
        %1598 = vmatprep.subr.bf16.mxu0 0
        %1599 = vmatpush1.bf16.xpose.msra.mxu0 0
        %1600 = vmatprep.subr.bf16.mxu0 0
        %1601 = vmatpush1.bf16.xpose.msra.mxu0 0
        %1602 = vmatprep.subr.bf16.mxu0 0
        %1603 = vmatpush1.bf16.xpose.msra.mxu0 0
        %1604 = vmatprep.subr.bf16.mxu0 0
        %1605 = vmatpush1.bf16.xpose.msra.mxu0 0
        %1606 = vmatprep.subr.bf16.mxu0 0
        %1607 = vmatpush1.bf16.xpose.msra.mxu0 0
        %1608 = vmatprep.subr.bf16.mxu0 0
        %1609 = vmatpush1.bf16.xpose.msra.mxu0 0
        %1610 = vmatprep.subr.bf16.mxu0 0
        %1611 = vmatpush1.bf16.xpose.msra.mxu0 0
        %1612 = vmatprep.subr.bf16.mxu0 0
        %1613 = vmatpush1.bf16.xpose.msra.mxu0 0
        %1614 = vmatprep.subr.bf16.mxu0 0
        %1615 = vmatpush1.bf16.xpose.msra.mxu0 0
        %1616 = vmatprep.subr.bf16.mxu0 0
        %1617 = vmatpush1.bf16.xpose.msra.mxu0 0
        %1618 = vmatprep.subr.bf16.mxu0 0
        %1619 = vmatpush1.bf16.xpose.msra.mxu0 0
        %1620 = vmatprep.subr.bf16.mxu0 0
        %1621 = vmatpush1.bf16.xpose.msra.mxu0 0
        %1622 = vmatprep.subr.bf16.mxu0 0
        %1623 = vmatpush1.bf16.xpose.msra.mxu0 0
        %1624 = vmatprep.subr.bf16.mxu0 0
        %1625 = vmatpush1.bf16.xpose.msra.mxu0 0
        %1626 = vmatprep.subr.bf16.mxu0 0
        %1627 = vmatpush1.bf16.xpose.msra.mxu0 0
        %1628 = vmatprep.mubr.bf16.mxu0 0
        %1629 = vmatmul.mubr.bf16.gmra.mrb[0].mxu0 %v1591
        %v1630 = vpop.f32.mrb[0].mxu0
        %v1631 = vadd.f32 0.0, %v1630
        %v1632 = vpop.f32.mrb[0].mxu0
        %v1633 = vpop.f32.mrb[0].mxu0
        %v1634 = vpop.f32.mrb[0].mxu0
        %1635 = vdwg.mxu0
        %v1636 = vmul.f32 %v1493, 0.35355338
        %v1637 = vmul.f32 %v1539, 0.35355338
        %v1638 = vmul.f32 %v1585, 0.35355338
        %v1639 = vmul.f32 %v1631, 0.35355338
        %v1640 = vsel %vm1451, %v1636, -inf
        %1641 = vmax.xlane.f32.xlu0 %v1640
        %v1642 = vpop.xlane.xlu0 %1641
        %v1643 = vsel %vm1451, %v1637, -inf
        %1644 = vmax.xlane.f32.xlu0 %v1643
        %v1645 = vpop.xlane.xlu0 %1644
        %v1646 = vsel %vm1451, %v1638, -inf
        %1647 = vmax.xlane.f32.xlu0 %v1646
        %v1648 = vpop.xlane.xlu0 %1647
        %v1649 = vsel %vm1451, %v1639, -inf
        %1650 = vmax.xlane.f32.xlu0 %v1649
        %v1651 = vpop.xlane.xlu0 %1650
        %v1652 = vsub.f32 %v1636, %v1642
        %v1653 = vsub.f32 %v1637, %v1645
        %v1654 = vsub.f32 %v1638, %v1648
        %v1655 = vsub.f32 %v1639, %v1651
        %v1656 = vmul.f32 %v1652, 1.442695
        %v1657 = vpow.pop %v1656
        %v1658 = vmul.f32 %v1653, 1.442695
        %v1659 = vpow.pop %v1658
        %v1660 = vmul.f32 %v1654, 1.442695
        %v1661 = vpow.pop %v1660
        %v1662 = vmul.f32 %v1655, 1.442695
        %v1663 = vpow.pop %v1662
        %v1664 = vsel %vm1451, %v1657, 0.0
        %1665 = vadd.xlane.f32.xlu0 %v1664
        %v1666 = vpop.xlane.xlu0 %1665
        %v1667 = vsel %vm1451, %v1659, 0.0
        %1668 = vadd.xlane.f32.xlu0 %v1667
        %v1669 = vpop.xlane.xlu0 %1668
        %v1670 = vsel %vm1451, %v1661, 0.0
        %1671 = vadd.xlane.f32.xlu0 %v1670
        %v1672 = vpop.xlane.xlu0 %1671
        %v1673 = vsel %vm1451, %v1663, 0.0
        %1674 = vadd.xlane.f32.xlu0 %v1673
        %v1675 = vpop.xlane.xlu0 %1674
        %v1676 = vpack.c.bf16 %v1657, %v1657
        %v1677 = vpack.c.bf16 %v1659, %v1659
        %v1678 = vpack.c.bf16 %v1661, %v1661
        %v1679 = vpack.c.bf16 %v1663, %v1663
        %v1680 = vpack.c.bf16 %v1282, %v1282
        %v1681 = vpack.c.bf16 %v1334, %v1334
        %v1682 = vpack.c.bf16 %v1386, %v1386
        %v1683 = vpack.c.bf16 %v1438, %v1438
        %v1685 = vsel %vm1451, %v1676, 0
        %vm1687 = vcmask 1043456
        %v1689 = vsel %vm1687, %v1680, 0
        %1691 = vmatprep.subr.bf16.mxu0 0
        %1692 = vmatpush1.bf16.msra.mxu0 %v1689
        %1693 = vmatprep.subr.bf16.mxu0 0
        %1694 = vmatpush1.bf16.msra.mxu0 0
        %1695 = vmatprep.subr.bf16.mxu0 0
        %1696 = vmatpush1.bf16.msra.mxu0 0
        %1697 = vmatprep.subr.bf16.mxu0 0
        %1698 = vmatpush1.bf16.msra.mxu0 0
        %1699 = vmatprep.subr.bf16.mxu0 0
        %1700 = vmatpush1.bf16.msra.mxu0 0
        %1701 = vmatprep.subr.bf16.mxu0 0
        %1702 = vmatpush1.bf16.msra.mxu0 0
        %1703 = vmatprep.subr.bf16.mxu0 0
        %1704 = vmatpush1.bf16.msra.mxu0 0
        %1705 = vmatprep.subr.bf16.mxu0 0
        %1706 = vmatpush1.bf16.msra.mxu0 0
        %1707 = vmatprep.subr.bf16.mxu0 0
        %1708 = vmatpush1.bf16.msra.mxu0 0
        %1709 = vmatprep.subr.bf16.mxu0 0
        %1710 = vmatpush1.bf16.msra.mxu0 0
        %1711 = vmatprep.subr.bf16.mxu0 0
        %1712 = vmatpush1.bf16.msra.mxu0 0
        %1713 = vmatprep.subr.bf16.mxu0 0
        %1714 = vmatpush1.bf16.msra.mxu0 0
        %1715 = vmatprep.subr.bf16.mxu0 0
        %1716 = vmatpush1.bf16.msra.mxu0 0
        %1717 = vmatprep.subr.bf16.mxu0 0
        %1718 = vmatpush1.bf16.msra.mxu0 0
        %1719 = vmatprep.subr.bf16.mxu0 0
        %1720 = vmatpush1.bf16.msra.mxu0 0
        %1721 = vmatprep.subr.bf16.mxu0 0
        %1722 = vmatpush1.bf16.msra.mxu0 0
        %1723 = vmatprep.mubr.bf16.mxu0 0
        %1724 = vmatmul.mubr.bf16.gmra.mrb[0].mxu0 %v1685
        %v1725 = vpop.f32.mrb[0].mxu0
        %v1726 = vadd.f32 0.0, %v1725
        %v1727 = vpop.f32.mrb[0].mxu0
        %v1728 = vpop.f32.mrb[0].mxu0
        %v1729 = vpop.f32.mrb[0].mxu0
        %1730 = vdwg.mxu0
        %v1732 = vsel %vm1451, %v1677, 0
        %v1735 = vsel %vm1687, %v1681, 0
        %1737 = vmatprep.subr.bf16.mxu0 0
        %1738 = vmatpush1.bf16.msra.mxu0 %v1735
        %1739 = vmatprep.subr.bf16.mxu0 0
        %1740 = vmatpush1.bf16.msra.mxu0 0
        %1741 = vmatprep.subr.bf16.mxu0 0
        %1742 = vmatpush1.bf16.msra.mxu0 0
        %1743 = vmatprep.subr.bf16.mxu0 0
        %1744 = vmatpush1.bf16.msra.mxu0 0
        %1745 = vmatprep.subr.bf16.mxu0 0
        %1746 = vmatpush1.bf16.msra.mxu0 0
        %1747 = vmatprep.subr.bf16.mxu0 0
        %1748 = vmatpush1.bf16.msra.mxu0 0
        %1749 = vmatprep.subr.bf16.mxu0 0
        %1750 = vmatpush1.bf16.msra.mxu0 0
        %1751 = vmatprep.subr.bf16.mxu0 0
        %1752 = vmatpush1.bf16.msra.mxu0 0
        %1753 = vmatprep.subr.bf16.mxu0 0
        %1754 = vmatpush1.bf16.msra.mxu0 0
        %1755 = vmatprep.subr.bf16.mxu0 0
        %1756 = vmatpush1.bf16.msra.mxu0 0
        %1757 = vmatprep.subr.bf16.mxu0 0
        %1758 = vmatpush1.bf16.msra.mxu0 0
        %1759 = vmatprep.subr.bf16.mxu0 0
        %1760 = vmatpush1.bf16.msra.mxu0 0
        %1761 = vmatprep.subr.bf16.mxu0 0
        %1762 = vmatpush1.bf16.msra.mxu0 0
        %1763 = vmatprep.subr.bf16.mxu0 0
        %1764 = vmatpush1.bf16.msra.mxu0 0
        %1765 = vmatprep.subr.bf16.mxu0 0
        %1766 = vmatpush1.bf16.msra.mxu0 0
        %1767 = vmatprep.subr.bf16.mxu0 0
        %1768 = vmatpush1.bf16.msra.mxu0 0
        %1769 = vmatprep.mubr.bf16.mxu0 0
        %1770 = vmatmul.mubr.bf16.gmra.mrb[0].mxu0 %v1732
        %v1771 = vpop.f32.mrb[0].mxu0
        %v1772 = vadd.f32 0.0, %v1771
        %v1773 = vpop.f32.mrb[0].mxu0
        %v1774 = vpop.f32.mrb[0].mxu0
        %v1775 = vpop.f32.mrb[0].mxu0
        %1776 = vdwg.mxu0
        %v1778 = vsel %vm1451, %v1678, 0
        %v1781 = vsel %vm1687, %v1682, 0
        %1783 = vmatprep.subr.bf16.mxu0 0
        %1784 = vmatpush1.bf16.msra.mxu0 %v1781
        %1785 = vmatprep.subr.bf16.mxu0 0
        %1786 = vmatpush1.bf16.msra.mxu0 0
        %1787 = vmatprep.subr.bf16.mxu0 0
        %1788 = vmatpush1.bf16.msra.mxu0 0
        %1789 = vmatprep.subr.bf16.mxu0 0
        %1790 = vmatpush1.bf16.msra.mxu0 0
        %1791 = vmatprep.subr.bf16.mxu0 0
        %1792 = vmatpush1.bf16.msra.mxu0 0
        %1793 = vmatprep.subr.bf16.mxu0 0
        %1794 = vmatpush1.bf16.msra.mxu0 0
        %1795 = vmatprep.subr.bf16.mxu0 0
        %1796 = vmatpush1.bf16.msra.mxu0 0
        %1797 = vmatprep.subr.bf16.mxu0 0
        %1798 = vmatpush1.bf16.msra.mxu0 0
        %1799 = vmatprep.subr.bf16.mxu0 0
        %1800 = vmatpush1.bf16.msra.mxu0 0
        %1801 = vmatprep.subr.bf16.mxu0 0
        %1802 = vmatpush1.bf16.msra.mxu0 0
        %1803 = vmatprep.subr.bf16.mxu0 0
        %1804 = vmatpush1.bf16.msra.mxu0 0
        %1805 = vmatprep.subr.bf16.mxu0 0
        %1806 = vmatpush1.bf16.msra.mxu0 0
        %1807 = vmatprep.subr.bf16.mxu0 0
        %1808 = vmatpush1.bf16.msra.mxu0 0
        %1809 = vmatprep.subr.bf16.mxu0 0
        %1810 = vmatpush1.bf16.msra.mxu0 0
        %1811 = vmatprep.subr.bf16.mxu0 0
        %1812 = vmatpush1.bf16.msra.mxu0 0
        %1813 = vmatprep.subr.bf16.mxu0 0
        %1814 = vmatpush1.bf16.msra.mxu0 0
        %1815 = vmatprep.mubr.bf16.mxu0 0
        %1816 = vmatmul.mubr.bf16.gmra.mrb[0].mxu0 %v1778
        %v1817 = vpop.f32.mrb[0].mxu0
        %v1818 = vadd.f32 0.0, %v1817
        %v1819 = vpop.f32.mrb[0].mxu0
        %v1820 = vpop.f32.mrb[0].mxu0
        %v1821 = vpop.f32.mrb[0].mxu0
        %1822 = vdwg.mxu0
        %v1824 = vsel %vm1451, %v1679, 0
        %v1827 = vsel %vm1687, %v1683, 0
        %1829 = vmatprep.subr.bf16.mxu0 0
        %1830 = vmatpush1.bf16.msra.mxu0 %v1827
        %1831 = vmatprep.subr.bf16.mxu0 0
        %1832 = vmatpush1.bf16.msra.mxu0 0
        %1833 = vmatprep.subr.bf16.mxu0 0
        %1834 = vmatpush1.bf16.msra.mxu0 0
        %1835 = vmatprep.subr.bf16.mxu0 0
        %1836 = vmatpush1.bf16.msra.mxu0 0
        %1837 = vmatprep.subr.bf16.mxu0 0
        %1838 = vmatpush1.bf16.msra.mxu0 0
        %1839 = vmatprep.subr.bf16.mxu0 0
        %1840 = vmatpush1.bf16.msra.mxu0 0
        %1841 = vmatprep.subr.bf16.mxu0 0
        %1842 = vmatpush1.bf16.msra.mxu0 0
        %1843 = vmatprep.subr.bf16.mxu0 0
        %1844 = vmatpush1.bf16.msra.mxu0 0
        %1845 = vmatprep.subr.bf16.mxu0 0
        %1846 = vmatpush1.bf16.msra.mxu0 0
        %1847 = vmatprep.subr.bf16.mxu0 0
        %1848 = vmatpush1.bf16.msra.mxu0 0
        %1849 = vmatprep.subr.bf16.mxu0 0
        %1850 = vmatpush1.bf16.msra.mxu0 0
        %1851 = vmatprep.subr.bf16.mxu0 0
        %1852 = vmatpush1.bf16.msra.mxu0 0
        %1853 = vmatprep.subr.bf16.mxu0 0
        %1854 = vmatpush1.bf16.msra.mxu0 0
        %1855 = vmatprep.subr.bf16.mxu0 0
        %1856 = vmatpush1.bf16.msra.mxu0 0
        %1857 = vmatprep.subr.bf16.mxu0 0
        %1858 = vmatpush1.bf16.msra.mxu0 0
        %1859 = vmatprep.subr.bf16.mxu0 0
        %1860 = vmatpush1.bf16.msra.mxu0 0
        %1861 = vmatprep.mubr.bf16.mxu0 0
        %1862 = vmatmul.mubr.bf16.gmra.mrb[0].mxu0 %v1824
        %v1863 = vpop.f32.mrb[0].mxu0
        %v1864 = vadd.f32 0.0, %v1863
        %v1865 = vpop.f32.mrb[0].mxu0
        %v1866 = vpop.f32.mrb[0].mxu0
        %v1867 = vpop.f32.mrb[0].mxu0
        %1868 = vdwg.mxu0
        %v1869 = vrcp.pop %v1666
        %v1870 = vrcp.pop %v1669
        %v1871 = vrcp.pop %v1672
        %v1872 = vrcp.pop %v1675
        %v1873 = vmul.f32 %v1726, %v1869
        %v1874 = vmul.f32 %v1772, %v1870
        %v1875 = vmul.f32 %v1818, %v1871
        %v1876 = vmul.f32 %v1864, %v1872
        %v1877 = vpack.c.bf16 %v1873, %v1873
        %v1878 = vpack.c.bf16 %v1874, %v1874
        %v1879 = vpack.c.bf16 %v1875, %v1875
        %v1880 = vpack.c.bf16 %v1876, %v1876
        %v1881 = vld [vmem:[%s617] sm:$0xf]
        %v1882 = vld [vmem:[%s617 + $0x4] sm:$0xf]
        %v1883 = vld [vmem:[%s617 + $0x8] sm:$0xf]
        %v1884 = vld [vmem:[%s617 + $0xc] sm:$0xf]
        %v1886 = vsel %vm1451, %v1877, 0
        %v1889 = vsel %vm1687, %v1881, 0
        %1891 = vmatprep.subr.bf16.mxu0 0
        %1892 = vmatpush1.bf16.msra.mxu0 %v1889
        %1893 = vmatprep.subr.bf16.mxu0 0
        %1894 = vmatpush1.bf16.msra.mxu0 0
        %1895 = vmatprep.subr.bf16.mxu0 0
        %1896 = vmatpush1.bf16.msra.mxu0 0
        %1897 = vmatprep.subr.bf16.mxu0 0
        %1898 = vmatpush1.bf16.msra.mxu0 0
        %1899 = vmatprep.subr.bf16.mxu0 0
        %1900 = vmatpush1.bf16.msra.mxu0 0
        %1901 = vmatprep.subr.bf16.mxu0 0
        %1902 = vmatpush1.bf16.msra.mxu0 0
        %1903 = vmatprep.subr.bf16.mxu0 0
        %1904 = vmatpush1.bf16.msra.mxu0 0
        %1905 = vmatprep.subr.bf16.mxu0 0
        %1906 = vmatpush1.bf16.msra.mxu0 0
        %1907 = vmatprep.subr.bf16.mxu0 0
        %1908 = vmatpush1.bf16.msra.mxu0 0
        %1909 = vmatprep.subr.bf16.mxu0 0
        %1910 = vmatpush1.bf16.msra.mxu0 0
        %1911 = vmatprep.subr.bf16.mxu0 0
        %1912 = vmatpush1.bf16.msra.mxu0 0
        %1913 = vmatprep.subr.bf16.mxu0 0
        %1914 = vmatpush1.bf16.msra.mxu0 0
        %1915 = vmatprep.subr.bf16.mxu0 0
        %1916 = vmatpush1.bf16.msra.mxu0 0
        %1917 = vmatprep.subr.bf16.mxu0 0
        %1918 = vmatpush1.bf16.msra.mxu0 0
        %1919 = vmatprep.subr.bf16.mxu0 0
        %1920 = vmatpush1.bf16.msra.mxu0 0
        %1921 = vmatprep.subr.bf16.mxu0 0
        %1922 = vmatpush1.bf16.msra.mxu0 0
        %1923 = vmatprep.mubr.bf16.mxu0 0
        %1924 = vmatmul.mubr.bf16.gmra.mrb[0].mxu0 %v1886
        %v1925 = vpop.f32.mrb[0].mxu0
        %v1926 = vadd.f32 0.0, %v1925
        %v1927 = vpop.f32.mrb[0].mxu0
        %v1928 = vpop.f32.mrb[0].mxu0
        %v1929 = vpop.f32.mrb[0].mxu0
        %1930 = vdwg.mxu0
        %v1932 = vsel %vm1451, %v1878, 0
        %v1935 = vsel %vm1687, %v1882, 0
        %1937 = vmatprep.subr.bf16.mxu0 0
        %1938 = vmatpush1.bf16.msra.mxu0 %v1935
        %1939 = vmatprep.subr.bf16.mxu0 0
        %1940 = vmatpush1.bf16.msra.mxu0 0
        %1941 = vmatprep.subr.bf16.mxu0 0
        %1942 = vmatpush1.bf16.msra.mxu0 0
        %1943 = vmatprep.subr.bf16.mxu0 0
        %1944 = vmatpush1.bf16.msra.mxu0 0
        %1945 = vmatprep.subr.bf16.mxu0 0
        %1946 = vmatpush1.bf16.msra.mxu0 0
        %1947 = vmatprep.subr.bf16.mxu0 0
        %1948 = vmatpush1.bf16.msra.mxu0 0
        %1949 = vmatprep.subr.bf16.mxu0 0
        %1950 = vmatpush1.bf16.msra.mxu0 0
        %1951 = vmatprep.subr.bf16.mxu0 0
        %1952 = vmatpush1.bf16.msra.mxu0 0
        %1953 = vmatprep.subr.bf16.mxu0 0
        %1954 = vmatpush1.bf16.msra.mxu0 0
        %1955 = vmatprep.subr.bf16.mxu0 0
        %1956 = vmatpush1.bf16.msra.mxu0 0
        %1957 = vmatprep.subr.bf16.mxu0 0
        %1958 = vmatpush1.bf16.msra.mxu0 0
        %1959 = vmatprep.subr.bf16.mxu0 0
        %1960 = vmatpush1.bf16.msra.mxu0 0
        %1961 = vmatprep.subr.bf16.mxu0 0
        %1962 = vmatpush1.bf16.msra.mxu0 0
        %1963 = vmatprep.subr.bf16.mxu0 0
        %1964 = vmatpush1.bf16.msra.mxu0 0
        %1965 = vmatprep.subr.bf16.mxu0 0
        %1966 = vmatpush1.bf16.msra.mxu0 0
        %1967 = vmatprep.subr.bf16.mxu0 0
        %1968 = vmatpush1.bf16.msra.mxu0 0
        %1969 = vmatprep.mubr.bf16.mxu0 0
        %1970 = vmatmul.mubr.bf16.gmra.mrb[0].mxu0 %v1932
        %v1971 = vpop.f32.mrb[0].mxu0
        %v1972 = vadd.f32 0.0, %v1971
        %v1973 = vpop.f32.mrb[0].mxu0
        %v1974 = vpop.f32.mrb[0].mxu0
        %v1975 = vpop.f32.mrb[0].mxu0
        %1976 = vdwg.mxu0
        %v1978 = vsel %vm1451, %v1879, 0
        %v1981 = vsel %vm1687, %v1883, 0
        %1983 = vmatprep.subr.bf16.mxu0 0
        %1984 = vmatpush1.bf16.msra.mxu0 %v1981
        %1985 = vmatprep.subr.bf16.mxu0 0
        %1986 = vmatpush1.bf16.msra.mxu0 0
        %1987 = vmatprep.subr.bf16.mxu0 0
        %1988 = vmatpush1.bf16.msra.mxu0 0
        %1989 = vmatprep.subr.bf16.mxu0 0
        %1990 = vmatpush1.bf16.msra.mxu0 0
        %1991 = vmatprep.subr.bf16.mxu0 0
        %1992 = vmatpush1.bf16.msra.mxu0 0
        %1993 = vmatprep.subr.bf16.mxu0 0
        %1994 = vmatpush1.bf16.msra.mxu0 0
        %1995 = vmatprep.subr.bf16.mxu0 0
        %1996 = vmatpush1.bf16.msra.mxu0 0
        %1997 = vmatprep.subr.bf16.mxu0 0
        %1998 = vmatpush1.bf16.msra.mxu0 0
        %1999 = vmatprep.subr.bf16.mxu0 0
        %2000 = vmatpush1.bf16.msra.mxu0 0
        %2001 = vmatprep.subr.bf16.mxu0 0
        %2002 = vmatpush1.bf16.msra.mxu0 0
        %2003 = vmatprep.subr.bf16.mxu0 0
        %2004 = vmatpush1.bf16.msra.mxu0 0
        %2005 = vmatprep.subr.bf16.mxu0 0
        %2006 = vmatpush1.bf16.msra.mxu0 0
        %2007 = vmatprep.subr.bf16.mxu0 0
        %2008 = vmatpush1.bf16.msra.mxu0 0
        %2009 = vmatprep.subr.bf16.mxu0 0
        %2010 = vmatpush1.bf16.msra.mxu0 0
        %2011 = vmatprep.subr.bf16.mxu0 0
        %2012 = vmatpush1.bf16.msra.mxu0 0
        %2013 = vmatprep.subr.bf16.mxu0 0
        %2014 = vmatpush1.bf16.msra.mxu0 0
        %2015 = vmatprep.mubr.bf16.mxu0 0
        %2016 = vmatmul.mubr.bf16.gmra.mrb[0].mxu0 %v1978
        %v2017 = vpop.f32.mrb[0].mxu0
        %v2018 = vadd.f32 0.0, %v2017
        %v2019 = vpop.f32.mrb[0].mxu0
        %v2020 = vpop.f32.mrb[0].mxu0
        %v2021 = vpop.f32.mrb[0].mxu0
        %2022 = vdwg.mxu0
        %v2024 = vsel %vm1451, %v1880, 0
        %v2027 = vsel %vm1687, %v1884, 0
        %2029 = vmatprep.subr.bf16.mxu0 0
        %2030 = vmatpush1.bf16.msra.mxu0 %v2027
        %2031 = vmatprep.subr.bf16.mxu0 0
        %2032 = vmatpush1.bf16.msra.mxu0 0
        %2033 = vmatprep.subr.bf16.mxu0 0
        %2034 = vmatpush1.bf16.msra.mxu0 0
        %2035 = vmatprep.subr.bf16.mxu0 0
        %2036 = vmatpush1.bf16.msra.mxu0 0
        %2037 = vmatprep.subr.bf16.mxu0 0
        %2038 = vmatpush1.bf16.msra.mxu0 0
        %2039 = vmatprep.subr.bf16.mxu0 0
        %2040 = vmatpush1.bf16.msra.mxu0 0
        %2041 = vmatprep.subr.bf16.mxu0 0
        %2042 = vmatpush1.bf16.msra.mxu0 0
        %2043 = vmatprep.subr.bf16.mxu0 0
        %2044 = vmatpush1.bf16.msra.mxu0 0
        %2045 = vmatprep.subr.bf16.mxu0 0
        %2046 = vmatpush1.bf16.msra.mxu0 0
        %2047 = vmatprep.subr.bf16.mxu0 0
        %2048 = vmatpush1.bf16.msra.mxu0 0
        %2049 = vmatprep.subr.bf16.mxu0 0
        %2050 = vmatpush1.bf16.msra.mxu0 0
        %2051 = vmatprep.subr.bf16.mxu0 0
        %2052 = vmatpush1.bf16.msra.mxu0 0
        %2053 = vmatprep.subr.bf16.mxu0 0
        %2054 = vmatpush1.bf16.msra.mxu0 0
        %2055 = vmatprep.subr.bf16.mxu0 0
        %2056 = vmatpush1.bf16.msra.mxu0 0
        %2057 = vmatprep.subr.bf16.mxu0 0
        %2058 = vmatpush1.bf16.msra.mxu0 0
        %2059 = vmatprep.subr.bf16.mxu0 0
        %2060 = vmatpush1.bf16.msra.mxu0 0
        %2061 = vmatprep.mubr.bf16.mxu0 0
        %2062 = vmatmul.mubr.bf16.gmra.mrb[0].mxu0 %v2024
        %v2063 = vpop.f32.mrb[0].mxu0
        %v2064 = vadd.f32 0.0, %v2063
        %v2065 = vpop.f32.mrb[0].mxu0
        %v2066 = vpop.f32.mrb[0].mxu0
        %v2067 = vpop.f32.mrb[0].mxu0
        %2068 = vdwg.mxu0
        %v2069 = vsel %vm654, %v1926, 0.0
        %v2070 = vsel %vm654, %v1972, 0.0
        %v2071 = vadd.f32 %v2069, %v2070
        %v2072 = vsel %vm654, %v2018, 0.0
        %v2073 = vadd.f32 %v2071, %v2072
        %v2074 = vsel %vm654, %v2064, 0.0
        %v2075 = vadd.f32 %v2073, %v2074
        %v2076 = vld [vmem:[%s620] sm:$0x1]
        %v2078 = vlaneseq
        %v2079 = vshrl.u32 %v2078, 7
        %v2080 = vsub.s32 0, %v2079
        %v2081 = vrot.slane %v2076, %v2080
        %v2083 = vadd.f32 %v2075, %v2081
        %v2084 = vadd.f32 %v651, %v2083
        %v2085 = vld [vmem:[%s623] sm:$0x1]
        %v2086 = vld [vmem:[%s626] sm:$0x1]
        %v2087 = vsel %vm654, %v2084, 0.0
        %2088 = vadd.xlane.f32.xlu0 %v2087
        %v2089 = vpop.xlane.xlu0 %2088
        %v2090 = vmul.f32 %v2089, %v658
        %v2091 = vsub.f32 %v2084, %v2090
        %v2092 = vmul.f32 %v2091, %v2091
        %v2093 = vsel %vm654, %v2092, 0.0
        %2094 = vadd.xlane.f32.xlu0 %v2093
        %v2095 = vpop.xlane.xlu0 %2094
        %v2096 = vmul.f32 %v2095, %v658
        %v2097 = vadd.f32 %v2096, 1e-07
        %v2098 = vrsqrt.pop %v2097
        %v2099 = vmul.f32 %v2091, %v2098
        %v2101 = vlaneseq
        %v2102 = vshrl.u32 %v2101, 7
        %v2103 = vsub.s32 0, %v2102
        %v2104 = vrot.slane %v2085, %v2103
        %v2106 = vmul.f32 %v2099, %v2104
        %v2108 = vlaneseq
        %v2109 = vshrl.u32 %v2108, 7
        %v2110 = vsub.s32 0, %v2109
        %v2111 = vrot.slane %v2086, %v2110
        %v2113 = vadd.f32 %v2106, %v2111
        %v2114 = vpack.c.bf16 %v2113, %v2113
        %v2115 = vld [vmem:[%s631] sm:$0xf]
        %v2116 = vld [vmem:[%s631 + $0x4] sm:$0xf]
        %v2117 = vld [vmem:[%s631 + $0x8] sm:$0xf]
        %v2118 = vld [vmem:[%s631 + $0xc] sm:$0xf]
        %v2119 = vld [vmem:[%s634] sm:$0x1]
        %v2121 = vlaneseq
        %v2122 = vshrl.u32 %v2121, 7
        %v2123 = vsub.s32 0, %v2122
        %v2124 = vrot.slane %v2119, %v2123
        %v2130 = vunpack.c.l.b16 %v2115
        %v2131 = vunpack.c.l.b16 %v2116
        %v2132 = vunpack.c.l.b16 %v2117
        %v2133 = vunpack.c.l.b16 %v2118
        %v2134 = vpack.c.b16 %v2131, %v2130
        %v2135 = vpack.c.b16 %v2133, %v2132
        %v2139 = vsel %vm654, %v2114, 0
        %2141 = vmatprep.subr.bf16.mxu0 0
        %2142 = vmatpush1.bf16.msra.mxu0 %v2134
        %2143 = vmatprep.subr.bf16.mxu0 0
        %2144 = vmatpush1.bf16.msra.mxu0 %v2135
        %2145 = vmatprep.subr.bf16.mxu0 0
        %2146 = vmatpush1.bf16.msra.mxu0 0
        %2147 = vmatprep.subr.bf16.mxu0 0
        %2148 = vmatpush1.bf16.msra.mxu0 0
        %2149 = vmatprep.subr.bf16.mxu0 0
        %2150 = vmatpush1.bf16.msra.mxu0 0
        %2151 = vmatprep.subr.bf16.mxu0 0
        %2152 = vmatpush1.bf16.msra.mxu0 0
        %2153 = vmatprep.subr.bf16.mxu0 0
        %2154 = vmatpush1.bf16.msra.mxu0 0
        %2155 = vmatprep.subr.bf16.mxu0 0
        %2156 = vmatpush1.bf16.msra.mxu0 0
        %2157 = vmatprep.subr.bf16.mxu0 0
        %2158 = vmatpush1.bf16.msra.mxu0 0
        %2159 = vmatprep.subr.bf16.mxu0 0
        %2160 = vmatpush1.bf16.msra.mxu0 0
        %2161 = vmatprep.subr.bf16.mxu0 0
        %2162 = vmatpush1.bf16.msra.mxu0 0
        %2163 = vmatprep.subr.bf16.mxu0 0
        %2164 = vmatpush1.bf16.msra.mxu0 0
        %2165 = vmatprep.subr.bf16.mxu0 0
        %2166 = vmatpush1.bf16.msra.mxu0 0
        %2167 = vmatprep.subr.bf16.mxu0 0
        %2168 = vmatpush1.bf16.msra.mxu0 0
        %2169 = vmatprep.subr.bf16.mxu0 0
        %2170 = vmatpush1.bf16.msra.mxu0 0
        %2171 = vmatprep.subr.bf16.mxu0 0
        %2172 = vmatpush1.bf16.msra.mxu0 0
        %2173 = vmatprep.mubr.bf16.mxu0 0
        %2174 = vmatmul.mubr.bf16.gmra.mrb[0].mxu0 %v2139
        %v2175 = vpop.f32.mrb[0].mxu0
        %v2176 = vadd.f32 %v2124, %v2175
        %v2177 = vpop.f32.mrb[0].mxu0
        %v2178 = vpop.f32.mrb[0].mxu0
        %v2179 = vpop.f32.mrb[0].mxu0
        %2180 = vdwg.mxu0
        %v2181 = vmax.f32 %v2176, 0.0
        %vm2182 = vcmp.ne.f32.partialorder %v2176, %v2176
        %v2183 = vadd.f32 %v2176, 0.0
        %v2184 = vand.u32 2147483647, %v2176
        %v2185 = vsub.f32 0.0, %v2184
        %v2186 = vmul.f32 %v2185, 1.442695
        %v2187 = vpow.pop %v2186
        %v2188 = vadd.f32 %v2187, 1.0
        %v2189 = vlog2.pop %v2188
        %v2190 = vmul.f32 %v2189, 0.6931472
        %v2191 = vmul.f32 -0.5, %v2187
        %v2192 = vadd.f32 %v2191, 1.0
        %v2193 = vmul.f32 %v2192, %v2187
        %v2194 = vand.u32 2147483647, %v2187
        %vm2195 = vcmp.lt.f32.partialorder %v2194, 0.0004427343
        %v2196 = vsel %vm2195, %v2193, %v2190
        %v2197 = vadd.f32 %v2181, %v2196
        %v2198 = vsel %vm2182, %v2183, %v2197
        %v2199 = vtanh.pop %v2198
        %v2200 = vmul.f32 %v2176, %v2199
        %v2201 = vpack.c.bf16 %v2200, %v2200
        %v2202 = vld [vmem:[%s639] sm:$0xf]
        %v2203 = vld [vmem:[%s639 + $0x4] sm:$0xf]
        %v2204 = vld [vmem:[%s639 + $0x8] sm:$0xf]
        %v2205 = vld [vmem:[%s639 + $0xc] sm:$0xf]
        %v2206 = vld [vmem:[%s639 + $0x10] sm:$0xf]
        %v2207 = vld [vmem:[%s639 + $0x14] sm:$0xf]
        %v2208 = vld [vmem:[%s639 + $0x18] sm:$0xf]
        %v2209 = vld [vmem:[%s639 + $0x1c] sm:$0xf]
        %v2210 = vld [vmem:[%s642] sm:$0x1]
        %v2212 = vlaneseq
        %v2213 = vshrl.u32 %v2212, 7
        %v2214 = vsub.s32 0, %v2213
        %v2215 = vrot.slane %v2210, %v2214
        %v2225 = vunpack.c.l.b16 %v2202
        %v2226 = vunpack.c.l.b16 %v2203
        %v2227 = vunpack.c.l.b16 %v2204
        %v2228 = vunpack.c.l.b16 %v2205
        %v2229 = vunpack.c.l.b16 %v2206
        %v2230 = vunpack.c.l.b16 %v2207
        %v2231 = vunpack.c.l.b16 %v2208
        %v2232 = vunpack.c.l.b16 %v2209
        %v2233 = vpack.c.b16 %v2226, %v2225
        %v2234 = vpack.c.b16 %v2228, %v2227
        %v2235 = vpack.c.b16 %v2230, %v2229
        %v2236 = vpack.c.b16 %v2232, %v2231
        %vm2241 = vcmask 523264
        %v2243 = vsel %vm2241, %v2201, 0
        %2245 = vmatprep.subr.bf16.mxu0 0
        %2246 = vmatpush1.bf16.msra.mxu0 %v2233
        %2247 = vmatprep.subr.bf16.mxu0 0
        %2248 = vmatpush1.bf16.msra.mxu0 %v2234
        %2249 = vmatprep.subr.bf16.mxu0 0
        %2250 = vmatpush1.bf16.msra.mxu0 %v2235
        %2251 = vmatprep.subr.bf16.mxu0 0
        %2252 = vmatpush1.bf16.msra.mxu0 %v2236
        %2253 = vmatprep.subr.bf16.mxu0 0
        %2254 = vmatpush1.bf16.msra.mxu0 0
        %2255 = vmatprep.subr.bf16.mxu0 0
        %2256 = vmatpush1.bf16.msra.mxu0 0
        %2257 = vmatprep.subr.bf16.mxu0 0
        %2258 = vmatpush1.bf16.msra.mxu0 0
        %2259 = vmatprep.subr.bf16.mxu0 0
        %2260 = vmatpush1.bf16.msra.mxu0 0
        %2261 = vmatprep.subr.bf16.mxu0 0
        %2262 = vmatpush1.bf16.msra.mxu0 0
        %2263 = vmatprep.subr.bf16.mxu0 0
        %2264 = vmatpush1.bf16.msra.mxu0 0
        %2265 = vmatprep.subr.bf16.mxu0 0
        %2266 = vmatpush1.bf16.msra.mxu0 0
        %2267 = vmatprep.subr.bf16.mxu0 0
        %2268 = vmatpush1.bf16.msra.mxu0 0
        %2269 = vmatprep.subr.bf16.mxu0 0
        %2270 = vmatpush1.bf16.msra.mxu0 0
        %2271 = vmatprep.subr.bf16.mxu0 0
        %2272 = vmatpush1.bf16.msra.mxu0 0
        %2273 = vmatprep.subr.bf16.mxu0 0
        %2274 = vmatpush1.bf16.msra.mxu0 0
        %2275 = vmatprep.subr.bf16.mxu0 0
        %2276 = vmatpush1.bf16.msra.mxu0 0
        %2277 = vmatprep.mubr.bf16.mxu0 0
        %2278 = vmatmul.mubr.bf16.gmra.mrb[0].mxu0 %v2243
        %v2279 = vpop.f32.mrb[0].mxu0
        %v2280 = vadd.f32 %v2215, %v2279
        %v2281 = vpop.f32.mrb[0].mxu0
        %v2282 = vpop.f32.mrb[0].mxu0
        %v2283 = vpop.f32.mrb[0].mxu0
        %2284 = vdwg.mxu0
        %v2285 = vadd.f32 %v2084, %v2280
        %2286 = vst.msk [vmem:[#allocation2] sm:$0xff] %vm654, %v2285
        %p2287 = scmp.eq.s32.totalorder %s32, 1
        // Predicated region
        $region77: #{tpu_custom_call.1} parent=71 // pred_check
          %p2288 = pneg %p2287
        $region78: #{tpu_custom_call.1} parent=71 // pred_check_branch
          %2290 = sbr.rel (%p2288) target = $region80
        $region79: #{tpu_custom_call.1} parent=71 // pred_region
          %2291 = vst.msk [vmem:[%s593] sm:$0xff] %vm654, %v2285
        $region80: #{tpu_custom_call.1} parent=71 // pred_fallthru
          _
        %s2292 = sand.u32 %s385, 1
        %s2293 = scalar_lea.sflag [#allocation4], %s2292
        %s2294 = sand.u32 %s385, 1
        %s2295 = smul.addr %s2294, 8
        %s2296 = scalar_lea.vmem [#allocation3], %s2295
        // Predicated region
        $region81: #{tpu_custom_call.1} parent=71 // pred_check
          %p2297 = pneg %p395
        $region82: #{tpu_custom_call.1} parent=71 // pred_check_branch
          %2299 = sbr.rel (%p2297) target = $region84
        $region83: #{tpu_custom_call.1} parent=71 // pred_region
          %s2301 = ssub.s32 128, 128
          %2302 = vsyncadd %s2293, %s2301
          %s2303 = smul.addr %s31, 128
          %s2304 = scalar_lea.hbm %s13, %s2303
          %s2306 = sshll.u32 %s2296, 4
          %s2307 = int_to_ptr.vmem [resolvable:$true] %s2306
          %2309 = dma.vmem_to_hbm [thread:$0]  %s2307, 128, %s2304, %s2293
        $region84: #{tpu_custom_call.1} parent=71 // pred_fallthru
          _
      $region72: #{tpu_custom_call.1} parent=5 // pred_fallthru
        _
      %p2310 = scmp.le.s32.totalorder 2, %s22
      // Predicated region
      $region85: #{tpu_custom_call.1} parent=5 // pred_check
        %p2311 = pneg %p2310
      $region86: #{tpu_custom_call.1} parent=5 // pred_check_branch
        %2313 = sbr.rel (%p2311) target = $region88
      $region87: #{tpu_custom_call.1} parent=5 // pred_region
        %s2314 = ssub.s32 %s22, 2
        // Predicated region
        $region89: #{tpu_custom_call.1} parent=87 // pred_check
          %p2315 = pneg %p401
        $region90: #{tpu_custom_call.1} parent=87 // pred_check_branch
          %2317 = sbr.rel (%p2315) target = $region92
        $region91: #{tpu_custom_call.1} parent=87 // pred_region
          %s2318 = sand.u32 %s386, 1
          %s2319 = scalar_lea.sflag [#allocation4], %s2318
          %s2320 = sand.u32 %s386, 1
          %s2321 = smul.addr %s2320, 8
          %s2322 = scalar_lea.vmem [#allocation3], %s2321
          %2323 = dma.done %s2319, 128
        $region92: #{tpu_custom_call.1} parent=87 // pred_fallthru
          _
      $region88: #{tpu_custom_call.1} parent=5 // pred_fallthru
        _
    $region6: #{tpu_custom_call.1} parent=1 // loop_footer
      %s26 = sadd.s32 1, %s22
    $region7: #{tpu_custom_call.1} parent=1 // loop_footer_branch
      %21 = sbr.rel target = $region3
    $region8: #{tpu_custom_call.1} parent=1 // loop_exit
      _
    %2324 = vsyncpa [#allocation4], 1
    %s2325 = scalar_lea.sflag [#allocation4], 1
    %2326 = vsyncpa %s2325, 1

</llo_original>
